<compile_context>
chip_gen: v5e
topology: v5e:2x2
jax: 0.10.0
libtpu: 0.0.40
codegen_flags: <defaults>
</compile_context>

<pallas_src>
import functools
import math

import jax
import jax.numpy as jnp
from jax.experimental import pallas as pl
from jax.experimental.pallas import tpu as pltpu

NEG_SLOPE = 0.02
LN_EPS = 1e-5
COMPUTE_DTYPE = jnp.bfloat16   # MXU input dtype for the big matmuls; f32 accum


def _round_up(v, m):
    return ((v + m - 1) // m) * m


def _leaky(v):
    # LeakyReLU(0.02): max(v, slope*v) is equivalent for 0 < slope < 1.
    return jnp.maximum(v, NEG_SLOPE * v)


def _choose_tile(n, block_batch):
    """Batch tile: multiple of 8 sublanes, and >= 2 grid steps when n allows it
    so the "parallel" grid axis can shard across both v7x TensorCores."""
    tb = _round_up(n, 8)
    if n > 8:
        tb = _round_up(pl.cdiv(n, 2), 8)
    tb = min(block_batch, tb)
    return _round_up(max(tb, 8), 8)


def _timestep_tables(mid):
    """Constant (1, mid) tables so temb = sin(t*freqs_full + shift) reproduces
    concat([sin(t*f), cos(t*f)]) (cos(x) == sin(x + pi/2))."""
    half = mid // 2
    freqs = jnp.exp(-math.log(10000.0)
                    * jnp.arange(half, dtype=jnp.float32) / (half - 1))
    freqs_full = jnp.concatenate([freqs, freqs])
    shift = jnp.concatenate([jnp.zeros((half,), jnp.float32),
                             jnp.full((half,), math.pi / 2, jnp.float32)])
    if mid % 2 == 1:                       # odd dim: zero-padded last column
        freqs_full = jnp.concatenate([freqs_full, jnp.zeros((1,), jnp.float32)])
        shift = jnp.concatenate([shift, jnp.zeros((1,), jnp.float32)])
    return freqs_full[None, :], shift[None, :]


def _prepare(params):
    """bf16 copies of the MXU weights + out_norm affine folded into out_fc.
    t_proj weight stays f32 (one matmul per tile, keeps sinusoid mantissa)."""
    cdt = COMPUTE_DTYPE
    go, bo = params["go"], params["bo"]
    wout, bout = params["wout"], params["bout"]
    wout_f = wout * go.reshape(-1, 1)          # LN gain folded into wout rows
    bout_f = bout + bo @ wout                  # LN bias folded into out bias
    return dict(
        wt=params["wt"], bt=params["bt"],
        w_in=params["w_in"],
        g1=params["g1"], b1=params["b1"], wfc1=params["wfc1"].astype(cdt),
        g2=params["g2"], b2=params["b2"], wfc2=params["wfc2"].astype(cdt),
        wenc=params["wenc"].astype(cdt), benc=params["benc"],
        wout=wout_f.astype(cdt), bout=bout_f,
    )


def decoder_kernel(num_layers, in_features, mid_features, stats_on_mxu,
                   x_ref, t_ref, freqs_ref, shift_ref,
                   wt_ref, bt_ref,             # t_proj Linear(mid, mid) + bias
                   w_in_ref,                   # in_fc Linear(in, mid), no bias
                   g1_ref, b1_ref, wfc1_ref,   # temporal: norm1, fc1
                   g2_ref, b2_ref, wfc2_ref,   # temporal: norm2, fc2
                   wenc_ref, benc_ref,         # temporal: enc Linear(mid,mid)+b
                   wout_ref, bout_ref,         # out_fc with folded out_norm affine
                   ones_ref,                   # (mid, mid) f32 ones for MXU stats
                   out_ref):
    inv_d = 1.0 / float(mid_features)
    cdt = wfc1_ref.dtype                       # bf16 MXU input dtype

    # ---- Fused sinusoidal timestep embedding (EUP sin, no HBM round trip) ----
    temb = jnp.sin(t_ref[...] * freqs_ref[...] + shift_ref[...])   # (TB, mid) f32

    # t_proj: f32 Linear(+bias) + LeakyReLU (runs once per tile).
    t_emb = _leaky(jnp.dot(temb, wt_ref[...],
                           preferred_element_type=jnp.float32) + bt_ref[...])

    # enc(t_emb) is identical for every temporal layer (one shared
    # TemporalLayer instance in the PyTorch Sequential) -> hoist.
    enc = jnp.dot(t_emb.astype(cdt), wenc_ref[...],
                  preferred_element_type=jnp.float32) + benc_ref[...]

    # in_fc (no bias): K = in_features (2) -> VPU broadcast FMAs, keeps the
    # MXU/vex slot free and avoids a K=2 systolic pass.
    x = x_ref[...]
    w_in = w_in_ref[...]
    h = x[:, 0:1] * w_in[0:1, :]
    for k in range(1, in_features):
        h = h + x[:, k:k + 1] * w_in[k:k + 1, :]

    ones = ones_ref[...] if stats_on_mxu else None

    def stats(v):
        # One-pass LayerNorm stats (var = E[x^2] - mean^2, clamped >= 0).
        # Default: row reductions go through the under-filled MXU via a
        # (mid, mid) ones matmul (result is already broadcast across lanes),
        # relieving the 2 XLU units which are otherwise the binding slot at
        # mid=128.  stats_on_mxu=False restores the XLU jnp.sum path.
        if stats_on_mxu:
            s = jnp.dot(v, ones, preferred_element_type=jnp.float32)
            ss = jnp.dot(v * v, ones, preferred_element_type=jnp.float32)
        else:
            s = jnp.sum(v, axis=-1, keepdims=True)
            ss = jnp.sum(v * v, axis=-1, keepdims=True)
        mu = s * inv_d
        var = jnp.maximum(ss * inv_d - mu * mu, 0.0)
        return mu, jax.lax.rsqrt(var + LN_EPS)

    # Hoist loop-invariant (1, mid) gains/biases (JAX does not CSE broadcasts).
    g1 = g1_ref[...]
    b1 = b1_ref[...]
    g2 = g2_ref[...]
    b2 = b2_ref[...]

    def layer(hh):
        mu, rs = stats(hh)
        a = _leaky((hh - mu) * rs * g1 + b1).astype(cdt)
        out = jnp.dot(a, wfc1_ref[...], preferred_element_type=jnp.float32) + enc
        mu, rs = stats(out)
        a = _leaky((out - mu) * rs * g2 + b2).astype(cdt)
        out = jnp.dot(a, wfc2_ref[...], preferred_element_type=jnp.float32)
        return out + hh                         # skip = Identity

    if num_layers <= 4:
        for _ in range(num_layers):             # small L: full unroll
            h = layer(h)
    else:                                       # large L: bounded live ranges
        h = jax.lax.fori_loop(0, num_layers, lambda _, hh: layer(hh), h,
                              unroll=2)

    # out_fc(out_norm(h)): affine is folded into wout/bout in the wrapper,
    # so only the normalization remains here.
    mu, rs = stats(h)
    hn = ((h - mu) * rs).astype(cdt)
    out_ref[...] = (jnp.dot(hn, wout_ref[...], preferred_element_type=jnp.float32)
                    + bout_ref[...]).astype(out_ref.dtype)


def get_timestep_embedding(t, embed_dim):
    """Sinusoidal timestep embedding (same formula as ddpm_torch), f32 ref."""
    half = embed_dim // 2
    freqs = jnp.exp(-math.log(10000.0)
                    * jnp.arange(half, dtype=jnp.float32) / (half - 1))
    emb = t.astype(jnp.float32)[:, None] * freqs[None, :]
    emb = jnp.concatenate([jnp.sin(emb), jnp.cos(emb)], axis=1)
    if embed_dim % 2 == 1:
        emb = jnp.pad(emb, ((0, 0), (0, 1)))
    return emb


def init_decoder_params(key, in_features, mid_features, out_features):
    """Deterministic synthetic init (torch-style uniform +/- 1/sqrt(fan_in))."""
    def lin(k, fan_in, fan_out):
        bound = 1.0 / math.sqrt(fan_in)
        kw, kb = jax.random.split(k)
        w = jax.random.uniform(kw, (fan_in, fan_out), jnp.float32, -bound, bound)
        b = jax.random.uniform(kb, (1, fan_out), jnp.float32, -bound, bound)
        return w, b

    ks = jax.random.split(key, 6)
    wt, bt = lin(ks[0], mid_features, mid_features)           # t_proj
    w_in, _ = lin(ks[1], in_features, mid_features)           # in_fc (no bias)
    wfc1, _ = lin(ks[2], mid_features, mid_features)          # temporal fc1
    wfc2, _ = lin(ks[3], mid_features, mid_features)          # temporal fc2
    wenc, benc = lin(ks[4], mid_features, mid_features)       # temporal enc
    wout, bout = lin(ks[5], mid_features, out_features)       # out_fc

    ones = jnp.ones((1, mid_features), jnp.float32)
    zeros = jnp.zeros((1, mid_features), jnp.float32)
    return dict(
        wt=wt, bt=bt, w_in=w_in,
        g1=ones, b1=zeros, wfc1=wfc1,
        g2=ones, b2=zeros, wfc2=wfc2,
        wenc=wenc, benc=benc,
        go=ones, bo=zeros,
        wout=wout, bout=bout,
    )


@functools.partial(jax.jit,
                   static_argnames=("mid_features", "num_temporal_layers",
                                    "block_batch", "stats_on_mxu"))
def decoder_forward(params, x, t, *, mid_features, num_temporal_layers,
                    block_batch=1024, stats_on_mxu=True):
    n, in_features = x.shape
    out_features = params["wout"].shape[1]

    p = _prepare(params)
    freqs, shift = _timestep_tables(mid_features)
    ones = jnp.ones((mid_features, mid_features), jnp.float32)
    t_col = t.astype(jnp.float32).reshape(n, 1)

    # Batch tiling: multiple of 8 sublanes; >= 2 grid steps when n allows so
    # the "parallel" axis can use both v7x TensorCores.  Pad to full tiles
    # (padded rows are finite through LN and never returned).
    tb = _choose_tile(n, block_batch)
    n_pad = _round_up(n, tb)
    if n_pad != n:
        x = jnp.pad(x, ((0, n_pad - n), (0, 0)))
        t_col = jnp.pad(t_col, ((0, n_pad - n), (0, 0)))
    grid = (n_pad // tb,)

    def row_spec(feat):      # tiled over the batch grid axis
        return pl.BlockSpec((tb, feat), lambda i: (i, 0))

    def const_spec(arr):     # resident in VMEM across grid steps
        # NOTE: at mid=128 all constants fit easily; when scaling mid up, add
        # pipeline_mode=pl.Buffered(1) here and/or raise vmem_limit_bytes
        # (v7x has only 64 MiB physical VMEM).
        return pl.BlockSpec(arr.shape, lambda i: (0, 0))

    in_specs = [
        row_spec(in_features),                 # x
        row_spec(1),                           # t column
        const_spec(freqs), const_spec(shift),
        const_spec(p["wt"]), const_spec(p["bt"]),
        const_spec(p["w_in"]),
        const_spec(p["g1"]), const_spec(p["b1"]), const_spec(p["wfc1"]),
        const_spec(p["g2"]), const_spec(p["b2"]), const_spec(p["wfc2"]),
        const_spec(p["wenc"]), const_spec(p["benc"]),
        const_spec(p["wout"]), const_spec(p["bout"]),
        const_spec(ones),
    ]

    out = pl.pallas_call(
        functools.partial(decoder_kernel, num_temporal_layers, in_features,
                          mid_features, stats_on_mxu),
        out_shape=jax.ShapeDtypeStruct((n_pad, out_features), jnp.float32),
        grid=grid,
        in_specs=in_specs,
        out_specs=row_spec(out_features),
        compiler_params=pltpu.CompilerParams(
            dimension_semantics=("parallel",)),  # shard batch tiles across TCs
    )(x, t_col, freqs, shift,
      p["wt"], p["bt"], p["w_in"],
      p["g1"], p["b1"], p["wfc1"],
      p["g2"], p["b2"], p["wfc2"],
      p["wenc"], p["benc"],
      p["wout"], p["bout"],
      ones)
    return out[:n]


def decoder_forward_ref_f32(params, x, t, mid_features, num_temporal_layers):
    """Pure-f32 JAX reference, mirrors the PyTorch forward exactly."""
    def ln(v, g, b):
        mu = jnp.mean(v, axis=-1, keepdims=True)
        var = jnp.mean((v - mu) ** 2, axis=-1, keepdims=True)
        return (v - mu) * jax.lax.rsqrt(var + LN_EPS) * g + b

    def lrelu(v):
        return jnp.where(v >= 0, v, NEG_SLOPE * v)

    temb = get_timestep_embedding(t, mid_features)
    t_emb = lrelu(temb @ params["wt"] + params["bt"])
    h = x @ params["w_in"]
    for _ in range(num_temporal_layers):
        out = lrelu(ln(h, params["g1"], params["b1"])) @ params["wfc1"]
        out = out + (t_emb @ params["wenc"] + params["benc"])
        out = lrelu(ln(out, params["g2"], params["b2"])) @ params["wfc2"]
        h = out + h
    h = ln(h, params["go"], params["bo"])
    return h @ params["wout"] + params["bout"]


def decoder_forward_ref_matched(params, x, t, mid_features, num_temporal_layers):
    """JAX reference using the same math policy as the kernel (fused sin
    embedding, bf16 MXU inputs / f32 accumulation, one-pass LN with MXU-style
    ones-matmul stats, folded out_norm affine) for tight-tolerance checks."""
    cdt = COMPUTE_DTYPE
    p = _prepare(params)
    freqs, shift = _timestep_tables(mid_features)
    inv_d = 1.0 / mid_features
    ones = jnp.ones((mid_features, mid_features), jnp.float32)
    hi = jax.lax.Precision.HIGHEST

    def stats(v):
        s = jnp.dot(v, ones, preferred_element_type=jnp.float32, precision=hi)
        ss = jnp.dot(v * v, ones, preferred_element_type=jnp.float32, precision=hi)
        mu = s * inv_d
        var = jnp.maximum(ss * inv_d - mu * mu, 0.0)
        return mu, jax.lax.rsqrt(var + LN_EPS)

    temb = jnp.sin(t.astype(jnp.float32)[:, None] * freqs + shift)
    t_emb = _leaky(jnp.dot(temb, p["wt"], preferred_element_type=jnp.float32,
                           precision=hi) + p["bt"])
    enc = jnp.dot(t_emb.astype(cdt), p["wenc"],
                  preferred_element_type=jnp.float32) + p["benc"]
    w_in = p["w_in"]
    h = x[:, 0:1] * w_in[0:1, :]
    for k in range(1, x.shape[1]):
        h = h + x[:, k:k + 1] * w_in[k:k + 1, :]
    for _ in range(num_temporal_layers):
        mu, rs = stats(h)
        a = _leaky((h - mu) * rs * p["g1"] + p["b1"]).astype(cdt)
        out = jnp.dot(a, p["wfc1"], preferred_element_type=jnp.float32) + enc
        mu, rs = stats(out)
        a = _leaky((out - mu) * rs * p["g2"] + p["b2"]).astype(cdt)
        out = jnp.dot(a, p["wfc2"], preferred_element_type=jnp.float32)
        h = out + h
    mu, rs = stats(h)
    hn = ((h - mu) * rs).astype(cdt)
    return jnp.dot(hn, p["wout"], preferred_element_type=jnp.float32) + p["bout"]


if __name__ == "__main__":
    # Toy diffusion decoder: x is a batch of 2-D points, t is integer timesteps.
    in_features = 2
    mid_features = 128
    out_features = 2
    num_temporal_layers = 2

    key = jax.random.PRNGKey(0)
    k_param, k_x, k_t, k_x2, k_t2 = jax.random.split(key, 5)
    params = init_decoder_params(k_param, in_features, mid_features,
                                 out_features)

    # Case 1: tiny batch (single grid step).
    batch = 8
    x = jax.random.normal(k_x, (batch, in_features), jnp.float32)
    t = jax.random.randint(k_t, (batch,), 0, 1000)
    out = jax.block_until_ready(
        decoder_forward(params, x, t, mid_features=mid_features,
                        num_temporal_layers=num_temporal_layers))
    assert out.shape == (batch, out_features)
    ref_m = decoder_forward_ref_matched(params, x, t, mid_features,
                                        num_temporal_layers)
    ref_f = decoder_forward_ref_f32(params, x, t, mid_features,
                                    num_temporal_layers)
    assert jnp.allclose(out, ref_m, atol=1e-2, rtol=1e-2), \
        "mismatch vs matched (bf16-policy) reference"
    assert jnp.allclose(out, ref_f, atol=1e-1, rtol=1e-1), \
        "mismatch vs f32 reference"

    # Case 2: multi-tile grid + batch-padding path (2 tiles of 104 rows, 8 padded).
    batch2 = 200
    x2 = jax.random.normal(k_x2, (batch2, in_features), jnp.float32)
    t2 = jax.random.randint(k_t2, (batch2,), 0, 1000)
    out2 = jax.block_until_ready(
        decoder_forward(params, x2, t2, mid_features=mid_features,
                        num_temporal_layers=num_temporal_layers,
                        block_batch=128))
    ref2 = decoder_forward_ref_matched(params, x2, t2, mid_features,
                                       num_temporal_layers)
    assert out2.shape == (batch2, out_features)
    assert jnp.allclose(out2, ref2, atol=1e-2, rtol=1e-2), \
        "mismatch (tiled) vs matched reference"

    print("KERNEL_OK")
</pallas_src>

<mosaic_0001>
module attributes {stable_mosaic.version = 11 : i64} {
  func.func @decoder_kernel(%arg0: i32, %arg1: memref<8x2xf32, #tpu.memory_space<vmem>>, %arg2: memref<8x1xf32, #tpu.memory_space<vmem>>, %arg3: memref<1x128xf32, #tpu.memory_space<vmem>>, %arg4: memref<1x128xf32, #tpu.memory_space<vmem>>, %arg5: memref<128x128xf32, #tpu.memory_space<vmem>>, %arg6: memref<1x128xf32, #tpu.memory_space<vmem>>, %arg7: memref<2x128xf32, #tpu.memory_space<vmem>>, %arg8: memref<1x128xf32, #tpu.memory_space<vmem>>, %arg9: memref<1x128xf32, #tpu.memory_space<vmem>>, %arg10: memref<128x128xbf16, #tpu.memory_space<vmem>>, %arg11: memref<1x128xf32, #tpu.memory_space<vmem>>, %arg12: memref<1x128xf32, #tpu.memory_space<vmem>>, %arg13: memref<128x128xbf16, #tpu.memory_space<vmem>>, %arg14: memref<128x128xbf16, #tpu.memory_space<vmem>>, %arg15: memref<1x128xf32, #tpu.memory_space<vmem>>, %arg16: memref<128x2xbf16, #tpu.memory_space<vmem>>, %arg17: memref<1x2xf32, #tpu.memory_space<vmem>>, %arg18: memref<128x128xf32, #tpu.memory_space<vmem>>, %arg19: memref<8x2xf32, #tpu.memory_space<vmem>>) attributes {dimension_semantics = [#tpu.dimension_semantics<parallel>], iteration_bounds = array<i64: 1>, scalar_prefetch = 0 : i64, scratch_operands = 0 : i64, tpu.core_type = #tpu.core_type<tc>, window_params = [{transform_indices = @transform_0, window_bounds = array<i64: 8, 2>}, {transform_indices = @transform_1, window_bounds = array<i64: 8, 1>}, {pipeline_mode = #tpu.pipeline_mode<synchronous>, transform_indices = @transform_2, window_bounds = array<i64: 1, 128>}, {pipeline_mode = #tpu.pipeline_mode<synchronous>, transform_indices = @transform_3, window_bounds = array<i64: 1, 128>}, {pipeline_mode = #tpu.pipeline_mode<synchronous>, transform_indices = @transform_4, window_bounds = array<i64: 128, 128>}, {pipeline_mode = #tpu.pipeline_mode<synchronous>, transform_indices = @transform_5, window_bounds = array<i64: 1, 128>}, {pipeline_mode = #tpu.pipeline_mode<synchronous>, transform_indices = @transform_6, window_bounds = array<i64: 2, 128>}, {pipeline_mode = #tpu.pipeline_mode<synchronous>, transform_indices = @transform_7, window_bounds = array<i64: 1, 128>}, {pipeline_mode = #tpu.pipeline_mode<synchronous>, transform_indices = @transform_8, window_bounds = array<i64: 1, 128>}, {pipeline_mode = #tpu.pipeline_mode<synchronous>, transform_indices = @transform_9, window_bounds = array<i64: 128, 128>}, {pipeline_mode = #tpu.pipeline_mode<synchronous>, transform_indices = @transform_10, window_bounds = array<i64: 1, 128>}, {pipeline_mode = #tpu.pipeline_mode<synchronous>, transform_indices = @transform_11, window_bounds = array<i64: 1, 128>}, {pipeline_mode = #tpu.pipeline_mode<synchronous>, transform_indices = @transform_12, window_bounds = array<i64: 128, 128>}, {pipeline_mode = #tpu.pipeline_mode<synchronous>, transform_indices = @transform_13, window_bounds = array<i64: 128, 128>}, {pipeline_mode = #tpu.pipeline_mode<synchronous>, transform_indices = @transform_14, window_bounds = array<i64: 1, 128>}, {pipeline_mode = #tpu.pipeline_mode<synchronous>, transform_indices = @transform_15, window_bounds = array<i64: 128, 2>}, {pipeline_mode = #tpu.pipeline_mode<synchronous>, transform_indices = @transform_16, window_bounds = array<i64: 1, 2>}, {pipeline_mode = #tpu.pipeline_mode<synchronous>, transform_indices = @transform_17, window_bounds = array<i64: 128, 128>}, {transform_indices = @transform_18, window_bounds = array<i64: 8, 2>}]} {
    %c0 = arith.constant 0 : index
    %c0_0 = arith.constant 0 : index
    %0 = vector.load %arg2[%c0, %c0_0] : memref<8x1xf32, #tpu.memory_space<vmem>>, vector<8x1xf32>
    %c0_1 = arith.constant 0 : index
    %c0_2 = arith.constant 0 : index
    %1 = vector.load %arg3[%c0_1, %c0_2] : memref<1x128xf32, #tpu.memory_space<vmem>>, vector<1x128xf32>
    %2 = vector.broadcast %0 : vector<8x1xf32> to vector<8x128xf32>
    %3 = vector.broadcast %1 : vector<1x128xf32> to vector<8x128xf32>
    %4 = arith.mulf %2, %3 : vector<8x128xf32>
    %c0_3 = arith.constant 0 : index
    %c0_4 = arith.constant 0 : index
    %5 = vector.load %arg4[%c0_3, %c0_4] : memref<1x128xf32, #tpu.memory_space<vmem>>, vector<1x128xf32>
    %6 = vector.broadcast %5 : vector<1x128xf32> to vector<8x128xf32>
    %7 = arith.addf %4, %6 : vector<8x128xf32>
    %8 = math.sin %7 : vector<8x128xf32>
    %c0_5 = arith.constant 0 : index
    %c0_6 = arith.constant 0 : index
    %9 = vector.load %arg5[%c0_5, %c0_6] : memref<128x128xf32, #tpu.memory_space<vmem>>, vector<128x128xf32>
    %cst = arith.constant dense<0.000000e+00> : vector<8x128xf32>
    %10 = tpu.matmul %8, %9, %cst {dimension_numbers = #tpu.dot_dimension_numbers<[1], [0], [0], [1], [0, 0, 1, 1], [], []>} : vector<8x128xf32>, vector<128x128xf32>, vector<8x128xf32> -> vector<8x128xf32>
    %c0_7 = arith.constant 0 : index
    %c0_8 = arith.constant 0 : index
    %11 = vector.load %arg6[%c0_7, %c0_8] : memref<1x128xf32, #tpu.memory_space<vmem>>, vector<1x128xf32>
    %12 = vector.broadcast %11 : vector<1x128xf32> to vector<8x128xf32>
    %13 = arith.addf %10, %12 : vector<8x128xf32>
    %cst_9 = arith.constant 2.000000e-02 : f32
    %14 = vector.broadcast %cst_9 : f32 to vector<8x128xf32>
    %15 = arith.mulf %14, %13 : vector<8x128xf32>
    %16 = arith.maximumf %13, %15 : vector<8x128xf32>
    %17 = arith.truncf %16 : vector<8x128xf32> to vector<8x128xbf16>
    %c0_10 = arith.constant 0 : index
    %c0_11 = arith.constant 0 : index
    %18 = vector.load %arg14[%c0_10, %c0_11] : memref<128x128xbf16, #tpu.memory_space<vmem>>, vector<128x128xbf16>
    %cst_12 = arith.constant dense<0.000000e+00> : vector<8x128xf32>
    %19 = tpu.matmul %17, %18, %cst_12 {dimension_numbers = #tpu.dot_dimension_numbers<[1], [0], [0], [1], [0, 0, 1, 1], [], []>} : vector<8x128xbf16>, vector<128x128xbf16>, vector<8x128xf32> -> vector<8x128xf32>
    %c0_13 = arith.constant 0 : index
    %c0_14 = arith.constant 0 : index
    %20 = vector.load %arg15[%c0_13, %c0_14] : memref<1x128xf32, #tpu.memory_space<vmem>>, vector<1x128xf32>
    %21 = vector.broadcast %20 : vector<1x128xf32> to vector<8x128xf32>
    %22 = arith.addf %19, %21 : vector<8x128xf32>
    %c0_15 = arith.constant 0 : index
    %c0_16 = arith.constant 0 : index
    %23 = vector.load %arg1[%c0_15, %c0_16] : memref<8x2xf32, #tpu.memory_space<vmem>>, vector<8x2xf32>
    %c0_17 = arith.constant 0 : index
    %c0_18 = arith.constant 0 : index
    %24 = vector.load %arg7[%c0_17, %c0_18] : memref<2x128xf32, #tpu.memory_space<vmem>>, vector<2x128xf32>
    %25 = vector.extract_strided_slice %23 {offsets = [0, 0], sizes = [8, 1], strides = [1, 1]} : vector<8x2xf32> to vector<8x1xf32>
    %26 = vector.extract_strided_slice %24 {offsets = [0, 0], sizes = [1, 128], strides = [1, 1]} : vector<2x128xf32> to vector<1x128xf32>
    %27 = vector.broadcast %25 : vector<8x1xf32> to vector<8x128xf32>
    %28 = vector.broadcast %26 : vector<1x128xf32> to vector<8x128xf32>
    %29 = arith.mulf %27, %28 : vector<8x128xf32>
    %30 = vector.extract_strided_slice %23 {offsets = [0, 1], sizes = [8, 1], strides = [1, 1]} : vector<8x2xf32> to vector<8x1xf32>
    %31 = vector.extract_strided_slice %24 {offsets = [1, 0], sizes = [1, 128], strides = [1, 1]} : vector<2x128xf32> to vector<1x128xf32>
    %32 = vector.broadcast %30 : vector<8x1xf32> to vector<8x128xf32>
    %33 = vector.broadcast %31 : vector<1x128xf32> to vector<8x128xf32>
    %34 = arith.mulf %32, %33 : vector<8x128xf32>
    %35 = arith.addf %29, %34 : vector<8x128xf32>
    %c0_19 = arith.constant 0 : index
    %c0_20 = arith.constant 0 : index
    %36 = vector.load %arg18[%c0_19, %c0_20] : memref<128x128xf32, #tpu.memory_space<vmem>>, vector<128x128xf32>
    %c0_21 = arith.constant 0 : index
    %c0_22 = arith.constant 0 : index
    %37 = vector.load %arg8[%c0_21, %c0_22] : memref<1x128xf32, #tpu.memory_space<vmem>>, vector<1x128xf32>
    %c0_23 = arith.constant 0 : index
    %c0_24 = arith.constant 0 : index
    %38 = vector.load %arg9[%c0_23, %c0_24] : memref<1x128xf32, #tpu.memory_space<vmem>>, vector<1x128xf32>
    %c0_25 = arith.constant 0 : index
    %c0_26 = arith.constant 0 : index
    %39 = vector.load %arg11[%c0_25, %c0_26] : memref<1x128xf32, #tpu.memory_space<vmem>>, vector<1x128xf32>
    %c0_27 = arith.constant 0 : index
    %c0_28 = arith.constant 0 : index
    %40 = vector.load %arg12[%c0_27, %c0_28] : memref<1x128xf32, #tpu.memory_space<vmem>>, vector<1x128xf32>
    %cst_29 = arith.constant dense<0.000000e+00> : vector<8x128xf32>
    %41 = tpu.matmul %35, %36, %cst_29 {dimension_numbers = #tpu.dot_dimension_numbers<[1], [0], [0], [1], [0, 0, 1, 1], [], []>} : vector<8x128xf32>, vector<128x128xf32>, vector<8x128xf32> -> vector<8x128xf32>
    %42 = arith.mulf %35, %35 : vector<8x128xf32>
    %cst_30 = arith.constant dense<0.000000e+00> : vector<8x128xf32>
    %43 = tpu.matmul %42, %36, %cst_30 {dimension_numbers = #tpu.dot_dimension_numbers<[1], [0], [0], [1], [0, 0, 1, 1], [], []>} : vector<8x128xf32>, vector<128x128xf32>, vector<8x128xf32> -> vector<8x128xf32>
    %cst_31 = arith.constant 7.812500e-03 : f32
    %44 = vector.broadcast %cst_31 : f32 to vector<8x128xf32>
    %45 = arith.mulf %41, %44 : vector<8x128xf32>
    %cst_32 = arith.constant 7.812500e-03 : f32
    %46 = vector.broadcast %cst_32 : f32 to vector<8x128xf32>
    %47 = arith.mulf %43, %46 : vector<8x128xf32>
    %48 = arith.mulf %45, %45 : vector<8x128xf32>
    %49 = arith.subf %47, %48 : vector<8x128xf32>
    %cst_33 = arith.constant 0.000000e+00 : f32
    %50 = vector.broadcast %cst_33 : f32 to vector<8x128xf32>
    %51 = arith.maximumf %49, %50 : vector<8x128xf32>
    %cst_34 = arith.constant 9.99999974E-6 : f32
    %52 = vector.broadcast %cst_34 : f32 to vector<8x128xf32>
    %53 = arith.addf %51, %52 : vector<8x128xf32>
    %54 = math.rsqrt %53 : vector<8x128xf32>
    %55 = arith.subf %35, %45 : vector<8x128xf32>
    %56 = arith.mulf %55, %54 : vector<8x128xf32>
    %57 = vector.broadcast %37 : vector<1x128xf32> to vector<8x128xf32>
    %58 = arith.mulf %56, %57 : vector<8x128xf32>
    %59 = vector.broadcast %38 : vector<1x128xf32> to vector<8x128xf32>
    %60 = arith.addf %58, %59 : vector<8x128xf32>
    %cst_35 = arith.constant 2.000000e-02 : f32
    %61 = vector.broadcast %cst_35 : f32 to vector<8x128xf32>
    %62 = arith.mulf %61, %60 : vector<8x128xf32>
    %63 = arith.maximumf %60, %62 : vector<8x128xf32>
    %64 = arith.truncf %63 : vector<8x128xf32> to vector<8x128xbf16>
    %c0_36 = arith.constant 0 : index
    %c0_37 = arith.constant 0 : index
    %65 = vector.load %arg10[%c0_36, %c0_37] : memref<128x128xbf16, #tpu.memory_space<vmem>>, vector<128x128xbf16>
    %cst_38 = arith.constant dense<0.000000e+00> : vector<8x128xf32>
    %66 = tpu.matmul %64, %65, %cst_38 {dimension_numbers = #tpu.dot_dimension_numbers<[1], [0], [0], [1], [0, 0, 1, 1], [], []>} : vector<8x128xbf16>, vector<128x128xbf16>, vector<8x128xf32> -> vector<8x128xf32>
    %67 = arith.addf %66, %22 : vector<8x128xf32>
    %cst_39 = arith.constant dense<0.000000e+00> : vector<8x128xf32>
    %68 = tpu.matmul %67, %36, %cst_39 {dimension_numbers = #tpu.dot_dimension_numbers<[1], [0], [0], [1], [0, 0, 1, 1], [], []>} : vector<8x128xf32>, vector<128x128xf32>, vector<8x128xf32> -> vector<8x128xf32>
    %69 = arith.mulf %67, %67 : vector<8x128xf32>
    %cst_40 = arith.constant dense<0.000000e+00> : vector<8x128xf32>
    %70 = tpu.matmul %69, %36, %cst_40 {dimension_numbers = #tpu.dot_dimension_numbers<[1], [0], [0], [1], [0, 0, 1, 1], [], []>} : vector<8x128xf32>, vector<128x128xf32>, vector<8x128xf32> -> vector<8x128xf32>
    %cst_41 = arith.constant 7.812500e-03 : f32
    %71 = vector.broadcast %cst_41 : f32 to vector<8x128xf32>
    %72 = arith.mulf %68, %71 : vector<8x128xf32>
    %cst_42 = arith.constant 7.812500e-03 : f32
    %73 = vector.broadcast %cst_42 : f32 to vector<8x128xf32>
    %74 = arith.mulf %70, %73 : vector<8x128xf32>
    %75 = arith.mulf %72, %72 : vector<8x128xf32>
    %76 = arith.subf %74, %75 : vector<8x128xf32>
    %cst_43 = arith.constant 0.000000e+00 : f32
    %77 = vector.broadcast %cst_43 : f32 to vector<8x128xf32>
    %78 = arith.maximumf %76, %77 : vector<8x128xf32>
    %cst_44 = arith.constant 9.99999974E-6 : f32
    %79 = vector.broadcast %cst_44 : f32 to vector<8x128xf32>
    %80 = arith.addf %78, %79 : vector<8x128xf32>
    %81 = math.rsqrt %80 : vector<8x128xf32>
    %82 = arith.subf %67, %72 : vector<8x128xf32>
    %83 = arith.mulf %82, %81 : vector<8x128xf32>
    %84 = vector.broadcast %39 : vector<1x128xf32> to vector<8x128xf32>
    %85 = arith.mulf %83, %84 : vector<8x128xf32>
    %86 = vector.broadcast %40 : vector<1x128xf32> to vector<8x128xf32>
    %87 = arith.addf %85, %86 : vector<8x128xf32>
    %cst_45 = arith.constant 2.000000e-02 : f32
    %88 = vector.broadcast %cst_45 : f32 to vector<8x128xf32>
    %89 = arith.mulf %88, %87 : vector<8x128xf32>
    %90 = arith.maximumf %87, %89 : vector<8x128xf32>
    %91 = arith.truncf %90 : vector<8x128xf32> to vector<8x128xbf16>
    %c0_46 = arith.constant 0 : index
    %c0_47 = arith.constant 0 : index
    %92 = vector.load %arg13[%c0_46, %c0_47] : memref<128x128xbf16, #tpu.memory_space<vmem>>, vector<128x128xbf16>
    %cst_48 = arith.constant dense<0.000000e+00> : vector<8x128xf32>
    %93 = tpu.matmul %91, %92, %cst_48 {dimension_numbers = #tpu.dot_dimension_numbers<[1], [0], [0], [1], [0, 0, 1, 1], [], []>} : vector<8x128xbf16>, vector<128x128xbf16>, vector<8x128xf32> -> vector<8x128xf32>
    %94 = arith.addf %93, %35 : vector<8x128xf32>
    %cst_49 = arith.constant dense<0.000000e+00> : vector<8x128xf32>
    %95 = tpu.matmul %94, %36, %cst_49 {dimension_numbers = #tpu.dot_dimension_numbers<[1], [0], [0], [1], [0, 0, 1, 1], [], []>} : vector<8x128xf32>, vector<128x128xf32>, vector<8x128xf32> -> vector<8x128xf32>
    %96 = arith.mulf %94, %94 : vector<8x128xf32>
    %cst_50 = arith.constant dense<0.000000e+00> : vector<8x128xf32>
    %97 = tpu.matmul %96, %36, %cst_50 {dimension_numbers = #tpu.dot_dimension_numbers<[1], [0], [0], [1], [0, 0, 1, 1], [], []>} : vector<8x128xf32>, vector<128x128xf32>, vector<8x128xf32> -> vector<8x128xf32>
    %cst_51 = arith.constant 7.812500e-03 : f32
    %98 = vector.broadcast %cst_51 : f32 to vector<8x128xf32>
    %99 = arith.mulf %95, %98 : vector<8x128xf32>
    %cst_52 = arith.constant 7.812500e-03 : f32
    %100 = vector.broadcast %cst_52 : f32 to vector<8x128xf32>
    %101 = arith.mulf %97, %100 : vector<8x128xf32>
    %102 = arith.mulf %99, %99 : vector<8x128xf32>
    %103 = arith.subf %101, %102 : vector<8x128xf32>
    %cst_53 = arith.constant 0.000000e+00 : f32
    %104 = vector.broadcast %cst_53 : f32 to vector<8x128xf32>
    %105 = arith.maximumf %103, %104 : vector<8x128xf32>
    %cst_54 = arith.constant 9.99999974E-6 : f32
    %106 = vector.broadcast %cst_54 : f32 to vector<8x128xf32>
    %107 = arith.addf %105, %106 : vector<8x128xf32>
    %108 = math.rsqrt %107 : vector<8x128xf32>
    %109 = arith.subf %94, %99 : vector<8x128xf32>
    %110 = arith.mulf %109, %108 : vector<8x128xf32>
    %111 = vector.broadcast %37 : vector<1x128xf32> to vector<8x128xf32>
    %112 = arith.mulf %110, %111 : vector<8x128xf32>
    %113 = vector.broadcast %38 : vector<1x128xf32> to vector<8x128xf32>
    %114 = arith.addf %112, %113 : vector<8x128xf32>
    %cst_55 = arith.constant 2.000000e-02 : f32
    %115 = vector.broadcast %cst_55 : f32 to vector<8x128xf32>
    %116 = arith.mulf %115, %114 : vector<8x128xf32>
    %117 = arith.maximumf %114, %116 : vector<8x128xf32>
    %118 = arith.truncf %117 : vector<8x128xf32> to vector<8x128xbf16>
    %c0_56 = arith.constant 0 : index
    %c0_57 = arith.constant 0 : index
    %119 = vector.load %arg10[%c0_56, %c0_57] : memref<128x128xbf16, #tpu.memory_space<vmem>>, vector<128x128xbf16>
    %cst_58 = arith.constant dense<0.000000e+00> : vector<8x128xf32>
    %120 = tpu.matmul %118, %119, %cst_58 {dimension_numbers = #tpu.dot_dimension_numbers<[1], [0], [0], [1], [0, 0, 1, 1], [], []>} : vector<8x128xbf16>, vector<128x128xbf16>, vector<8x128xf32> -> vector<8x128xf32>
    %121 = arith.addf %120, %22 : vector<8x128xf32>
    %cst_59 = arith.constant dense<0.000000e+00> : vector<8x128xf32>
    %122 = tpu.matmul %121, %36, %cst_59 {dimension_numbers = #tpu.dot_dimension_numbers<[1], [0], [0], [1], [0, 0, 1, 1], [], []>} : vector<8x128xf32>, vector<128x128xf32>, vector<8x128xf32> -> vector<8x128xf32>
    %123 = arith.mulf %121, %121 : vector<8x128xf32>
    %cst_60 = arith.constant dense<0.000000e+00> : vector<8x128xf32>
    %124 = tpu.matmul %123, %36, %cst_60 {dimension_numbers = #tpu.dot_dimension_numbers<[1], [0], [0], [1], [0, 0, 1, 1], [], []>} : vector<8x128xf32>, vector<128x128xf32>, vector<8x128xf32> -> vector<8x128xf32>
    %cst_61 = arith.constant 7.812500e-03 : f32
    %125 = vector.broadcast %cst_61 : f32 to vector<8x128xf32>
    %126 = arith.mulf %122, %125 : vector<8x128xf32>
    %cst_62 = arith.constant 7.812500e-03 : f32
    %127 = vector.broadcast %cst_62 : f32 to vector<8x128xf32>
    %128 = arith.mulf %124, %127 : vector<8x128xf32>
    %129 = arith.mulf %126, %126 : vector<8x128xf32>
    %130 = arith.subf %128, %129 : vector<8x128xf32>
    %cst_63 = arith.constant 0.000000e+00 : f32
    %131 = vector.broadcast %cst_63 : f32 to vector<8x128xf32>
    %132 = arith.maximumf %130, %131 : vector<8x128xf32>
    %cst_64 = arith.constant 9.99999974E-6 : f32
    %133 = vector.broadcast %cst_64 : f32 to vector<8x128xf32>
    %134 = arith.addf %132, %133 : vector<8x128xf32>
    %135 = math.rsqrt %134 : vector<8x128xf32>
    %136 = arith.subf %121, %126 : vector<8x128xf32>
    %137 = arith.mulf %136, %135 : vector<8x128xf32>
    %138 = vector.broadcast %39 : vector<1x128xf32> to vector<8x128xf32>
    %139 = arith.mulf %137, %138 : vector<8x128xf32>
    %140 = vector.broadcast %40 : vector<1x128xf32> to vector<8x128xf32>
    %141 = arith.addf %139, %140 : vector<8x128xf32>
    %cst_65 = arith.constant 2.000000e-02 : f32
    %142 = vector.broadcast %cst_65 : f32 to vector<8x128xf32>
    %143 = arith.mulf %142, %141 : vector<8x128xf32>
    %144 = arith.maximumf %141, %143 : vector<8x128xf32>
    %145 = arith.truncf %144 : vector<8x128xf32> to vector<8x128xbf16>
    %c0_66 = arith.constant 0 : index
    %c0_67 = arith.constant 0 : index
    %146 = vector.load %arg13[%c0_66, %c0_67] : memref<128x128xbf16, #tpu.memory_space<vmem>>, vector<128x128xbf16>
    %cst_68 = arith.constant dense<0.000000e+00> : vector<8x128xf32>
    %147 = tpu.matmul %145, %146, %cst_68 {dimension_numbers = #tpu.dot_dimension_numbers<[1], [0], [0], [1], [0, 0, 1, 1], [], []>} : vector<8x128xbf16>, vector<128x128xbf16>, vector<8x128xf32> -> vector<8x128xf32>
    %148 = arith.addf %147, %94 : vector<8x128xf32>
    %cst_69 = arith.constant dense<0.000000e+00> : vector<8x128xf32>
    %149 = tpu.matmul %148, %36, %cst_69 {dimension_numbers = #tpu.dot_dimension_numbers<[1], [0], [0], [1], [0, 0, 1, 1], [], []>} : vector<8x128xf32>, vector<128x128xf32>, vector<8x128xf32> -> vector<8x128xf32>
    %150 = arith.mulf %148, %148 : vector<8x128xf32>
    %cst_70 = arith.constant dense<0.000000e+00> : vector<8x128xf32>
    %151 = tpu.matmul %150, %36, %cst_70 {dimension_numbers = #tpu.dot_dimension_numbers<[1], [0], [0], [1], [0, 0, 1, 1], [], []>} : vector<8x128xf32>, vector<128x128xf32>, vector<8x128xf32> -> vector<8x128xf32>
    %cst_71 = arith.constant 7.812500e-03 : f32
    %152 = vector.broadcast %cst_71 : f32 to vector<8x128xf32>
    %153 = arith.mulf %149, %152 : vector<8x128xf32>
    %cst_72 = arith.constant 7.812500e-03 : f32
    %154 = vector.broadcast %cst_72 : f32 to vector<8x128xf32>
    %155 = arith.mulf %151, %154 : vector<8x128xf32>
    %156 = arith.mulf %153, %153 : vector<8x128xf32>
    %157 = arith.subf %155, %156 : vector<8x128xf32>
    %cst_73 = arith.constant 0.000000e+00 : f32
    %158 = vector.broadcast %cst_73 : f32 to vector<8x128xf32>
    %159 = arith.maximumf %157, %158 : vector<8x128xf32>
    %cst_74 = arith.constant 9.99999974E-6 : f32
    %160 = vector.broadcast %cst_74 : f32 to vector<8x128xf32>
    %161 = arith.addf %159, %160 : vector<8x128xf32>
    %162 = math.rsqrt %161 : vector<8x128xf32>
    %163 = arith.subf %148, %153 : vector<8x128xf32>
    %164 = arith.mulf %163, %162 : vector<8x128xf32>
    %165 = arith.truncf %164 : vector<8x128xf32> to vector<8x128xbf16>
    %c0_75 = arith.constant 0 : index
    %c0_76 = arith.constant 0 : index
    %166 = vector.load %arg16[%c0_75, %c0_76] : memref<128x2xbf16, #tpu.memory_space<vmem>>, vector<128x2xbf16>
    %cst_77 = arith.constant dense<0.000000e+00> : vector<8x2xf32>
    %167 = tpu.matmul %165, %166, %cst_77 {dimension_numbers = #tpu.dot_dimension_numbers<[1], [0], [0], [1], [0, 0, 1, 1], [], []>} : vector<8x128xbf16>, vector<128x2xbf16>, vector<8x2xf32> -> vector<8x2xf32>
    %c0_78 = arith.constant 0 : index
    %c0_79 = arith.constant 0 : index
    %168 = vector.load %arg17[%c0_78, %c0_79] : memref<1x2xf32, #tpu.memory_space<vmem>>, vector<1x2xf32>
    %169 = vector.broadcast %168 : vector<1x2xf32> to vector<8x2xf32>
    %170 = arith.addf %167, %169 : vector<8x2xf32>
    %c0_80 = arith.constant 0 : index
    %c0_81 = arith.constant 0 : index
    %171 = vector.load %arg19[%c0_80, %c0_81] : memref<8x2xf32, #tpu.memory_space<vmem>>, vector<8x2xf32>
    tpu.vector_store %arg19[%c0_80, %c0_81], %170 {strides = array<i32>} : memref<8x2xf32, #tpu.memory_space<vmem>>, vector<8x2xf32>,
    return
  }
  func.func @transform_0(%arg0: i32) -> (i32, i32) {
    %c0_i32 = arith.constant 0 : i32
    %c0_i32_0 = arith.constant 0 : i32
    return %arg0, %c0_i32 : i32, i32
  }
  func.func @transform_1(%arg0: i32) -> (i32, i32) {
    %c0_i32 = arith.constant 0 : i32
    %c0_i32_0 = arith.constant 0 : i32
    return %arg0, %c0_i32 : i32, i32
  }
  func.func @transform_2(%arg0: i32) -> (i32, i32) {
    %c0_i32 = arith.constant 0 : i32
    %c0_i32_0 = arith.constant 0 : i32
    %c0_i32_1 = arith.constant 0 : i32
    return %c0_i32, %c0_i32_0 : i32, i32
  }
  func.func @transform_3(%arg0: i32) -> (i32, i32) {
    %c0_i32 = arith.constant 0 : i32
    %c0_i32_0 = arith.constant 0 : i32
    %c0_i32_1 = arith.constant 0 : i32
    return %c0_i32, %c0_i32_0 : i32, i32
  }
  func.func @transform_4(%arg0: i32) -> (i32, i32) {
    %c0_i32 = arith.constant 0 : i32
    %c0_i32_0 = arith.constant 0 : i32
    %c0_i32_1 = arith.constant 0 : i32
    return %c0_i32, %c0_i32_0 : i32, i32
  }
  func.func @transform_5(%arg0: i32) -> (i32, i32) {
    %c0_i32 = arith.constant 0 : i32
    %c0_i32_0 = arith.constant 0 : i32
    %c0_i32_1 = arith.constant 0 : i32
    return %c0_i32, %c0_i32_0 : i32, i32
  }
  func.func @transform_6(%arg0: i32) -> (i32, i32) {
    %c0_i32 = arith.constant 0 : i32
    %c0_i32_0 = arith.constant 0 : i32
    %c0_i32_1 = arith.constant 0 : i32
    return %c0_i32, %c0_i32_0 : i32, i32
  }
  func.func @transform_7(%arg0: i32) -> (i32, i32) {
    %c0_i32 = arith.constant 0 : i32
    %c0_i32_0 = arith.constant 0 : i32
    %c0_i32_1 = arith.constant 0 : i32
    return %c0_i32, %c0_i32_0 : i32, i32
  }
  func.func @transform_8(%arg0: i32) -> (i32, i32) {
    %c0_i32 = arith.constant 0 : i32
    %c0_i32_0 = arith.constant 0 : i32
    %c0_i32_1 = arith.constant 0 : i32
    return %c0_i32, %c0_i32_0 : i32, i32
  }
  func.func @transform_9(%arg0: i32) -> (i32, i32) {
    %c0_i32 = arith.constant 0 : i32
    %c0_i32_0 = arith.constant 0 : i32
    %c0_i32_1 = arith.constant 0 : i32
    return %c0_i32, %c0_i32_0 : i32, i32
  }
  func.func @transform_10(%arg0: i32) -> (i32, i32) {
    %c0_i32 = arith.constant 0 : i32
    %c0_i32_0 = arith.constant 0 : i32
    %c0_i32_1 = arith.constant 0 : i32
    return %c0_i32, %c0_i32_0 : i32, i32
  }
  func.func @transform_11(%arg0: i32) -> (i32, i32) {
    %c0_i32 = arith.constant 0 : i32
    %c0_i32_0 = arith.constant 0 : i32
    %c0_i32_1 = arith.constant 0 : i32
    return %c0_i32, %c0_i32_0 : i32, i32
  }
  func.func @transform_12(%arg0: i32) -> (i32, i32) {
    %c0_i32 = arith.constant 0 : i32
    %c0_i32_0 = arith.constant 0 : i32
    %c0_i32_1 = arith.constant 0 : i32
    return %c0_i32, %c0_i32_0 : i32, i32
  }
  func.func @transform_13(%arg0: i32) -> (i32, i32) {
    %c0_i32 = arith.constant 0 : i32
    %c0_i32_0 = arith.constant 0 : i32
    %c0_i32_1 = arith.constant 0 : i32
    return %c0_i32, %c0_i32_0 : i32, i32
  }
  func.func @transform_14(%arg0: i32) -> (i32, i32) {
    %c0_i32 = arith.constant 0 : i32
    %c0_i32_0 = arith.constant 0 : i32
    %c0_i32_1 = arith.constant 0 : i32
    return %c0_i32, %c0_i32_0 : i32, i32
  }
  func.func @transform_15(%arg0: i32) -> (i32, i32) {
    %c0_i32 = arith.constant 0 : i32
    %c0_i32_0 = arith.constant 0 : i32
    %c0_i32_1 = arith.constant 0 : i32
    return %c0_i32, %c0_i32_0 : i32, i32
  }
  func.func @transform_16(%arg0: i32) -> (i32, i32) {
    %c0_i32 = arith.constant 0 : i32
    %c0_i32_0 = arith.constant 0 : i32
    %c0_i32_1 = arith.constant 0 : i32
    return %c0_i32, %c0_i32_0 : i32, i32
  }
  func.func @transform_17(%arg0: i32) -> (i32, i32) {
    %c0_i32 = arith.constant 0 : i32
    %c0_i32_0 = arith.constant 0 : i32
    %c0_i32_1 = arith.constant 0 : i32
    return %c0_i32, %c0_i32_0 : i32, i32
  }
  func.func @transform_18(%arg0: i32) -> (i32, i32) {
    %c0_i32 = arith.constant 0 : i32
    %c0_i32_0 = arith.constant 0 : i32
    return %arg0, %c0_i32 : i32, i32
  }
}

</mosaic_0001>

<llo_original>
// kernel: decoder_forward.1
$region0: #{decoder_forward.1}
  #allocation0 [shape = 'u32[]', space=smem, size = 0x4, offset = 0x4, fixed_abs, tag = 'smem constant byte address 0x4 - core index']
  #allocation1 [shape = 'u32[72,128]{1,0:T(1,128)}', space=vmem, size = 0x9000, scoped, tag = 'internal scratch']
  %s0 = inlined_call_operand.vmem [shape: f32[8,2], index: 0, kind: input, shape index: {}]
  %s1 = inlined_call_operand.vmem [shape: f32[8,1], index: 1, kind: input, shape index: {}]
  %s2 = inlined_call_operand.vmem [shape: f32[1,128], index: 2, kind: input, shape index: {}]
  %s3 = inlined_call_operand.vmem [shape: f32[1,128], index: 3, kind: input, shape index: {}]
  %s4 = inlined_call_operand.vmem [shape: f32[128,128], index: 4, kind: input, shape index: {}]
  %s5 = inlined_call_operand.vmem [shape: f32[1,128], index: 5, kind: input, shape index: {}]
  %s6 = inlined_call_operand.vmem [shape: f32[2,128], index: 6, kind: input, shape index: {}]
  %s7 = inlined_call_operand.vmem [shape: f32[1,128], index: 7, kind: input, shape index: {}]
  %s8 = inlined_call_operand.vmem [shape: f32[1,128], index: 8, kind: input, shape index: {}]
  %s9 = inlined_call_operand.vmem [shape: bf16[128,128], index: 9, kind: input, shape index: {}]
  %s10 = inlined_call_operand.vmem [shape: f32[1,128], index: 10, kind: input, shape index: {}]
  %s11 = inlined_call_operand.vmem [shape: f32[1,128], index: 11, kind: input, shape index: {}]
  %s12 = inlined_call_operand.vmem [shape: bf16[128,128], index: 12, kind: input, shape index: {}]
  %s13 = inlined_call_operand.vmem [shape: bf16[128,128], index: 13, kind: input, shape index: {}]
  %s14 = inlined_call_operand.vmem [shape: f32[1,128], index: 14, kind: input, shape index: {}]
  %s15 = inlined_call_operand.vmem [shape: bf16[128,2], index: 15, kind: input, shape index: {}]
  %s16 = inlined_call_operand.vmem [shape: f32[1,2], index: 16, kind: input, shape index: {}]
  %s17 = inlined_call_operand.vmem [shape: f32[128,128], index: 17, kind: input, shape index: {}]
  %s18 = inlined_call_operand.vmem [shape: f32[8,2], index: 18, kind: output, shape index: {}]
  %s19 = sld [smem:[#allocation0]]
  $region82: #{decoder_forward.1} parent=0
    _
  %s21 = ssub.s32 1, %s19
  %s22 = scalar_select 0, %s21, %s19
  // Predicated region
  $region2: #{decoder_forward.1} parent=0 // pred_check
    _
  $region3: #{decoder_forward.1} parent=0 // pred_check_branch
    %24 = sbr.rel (0) target = $region5
  $region4: #{decoder_forward.1} parent=0 // pred_region
    _
  $region5: #{decoder_forward.1} parent=0 // pred_fallthru
    _
  // Predicated region
  $region6: #{decoder_forward.1} parent=0 // pred_check
    _
  $region7: #{decoder_forward.1} parent=0 // pred_check_branch
    %26 = sbr.rel (0) target = $region9
  $region8: #{decoder_forward.1} parent=0 // pred_region
    _
  $region9: #{decoder_forward.1} parent=0 // pred_fallthru
    _
  // Predicated region
  $region10: #{decoder_forward.1} parent=0 // pred_check
    _
  $region11: #{decoder_forward.1} parent=0 // pred_check_branch
    %28 = sbr.rel (0) target = $region13
  $region12: #{decoder_forward.1} parent=0 // pred_region
    _
  $region13: #{decoder_forward.1} parent=0 // pred_fallthru
    _
  // Predicated region
  $region14: #{decoder_forward.1} parent=0 // pred_check
    _
  $region15: #{decoder_forward.1} parent=0 // pred_check_branch
    %30 = sbr.rel (0) target = $region17
  $region16: #{decoder_forward.1} parent=0 // pred_region
    _
  $region17: #{decoder_forward.1} parent=0 // pred_fallthru
    _
  // Predicated region
  $region18: #{decoder_forward.1} parent=0 // pred_check
    _
  $region19: #{decoder_forward.1} parent=0 // pred_check_branch
    %32 = sbr.rel (0) target = $region21
  $region20: #{decoder_forward.1} parent=0 // pred_region
    _
  $region21: #{decoder_forward.1} parent=0 // pred_fallthru
    _
  // Predicated region
  $region22: #{decoder_forward.1} parent=0 // pred_check
    _
  $region23: #{decoder_forward.1} parent=0 // pred_check_branch
    %34 = sbr.rel (0) target = $region25
  $region24: #{decoder_forward.1} parent=0 // pred_region
    _
  $region25: #{decoder_forward.1} parent=0 // pred_fallthru
    _
  // Predicated region
  $region26: #{decoder_forward.1} parent=0 // pred_check
    _
  $region27: #{decoder_forward.1} parent=0 // pred_check_branch
    %36 = sbr.rel (0) target = $region29
  $region28: #{decoder_forward.1} parent=0 // pred_region
    _
  $region29: #{decoder_forward.1} parent=0 // pred_fallthru
    _
  // Predicated region
  $region30: #{decoder_forward.1} parent=0 // pred_check
    _
  $region31: #{decoder_forward.1} parent=0 // pred_check_branch
    %38 = sbr.rel (0) target = $region33
  $region32: #{decoder_forward.1} parent=0 // pred_region
    _
  $region33: #{decoder_forward.1} parent=0 // pred_fallthru
    _
  // Predicated region
  $region34: #{decoder_forward.1} parent=0 // pred_check
    _
  $region35: #{decoder_forward.1} parent=0 // pred_check_branch
    %40 = sbr.rel (0) target = $region37
  $region36: #{decoder_forward.1} parent=0 // pred_region
    _
  $region37: #{decoder_forward.1} parent=0 // pred_fallthru
    _
  // Predicated region
  $region38: #{decoder_forward.1} parent=0 // pred_check
    _
  $region39: #{decoder_forward.1} parent=0 // pred_check_branch
    %42 = sbr.rel (0) target = $region41
  $region40: #{decoder_forward.1} parent=0 // pred_region
    _
  $region41: #{decoder_forward.1} parent=0 // pred_fallthru
    _
  // Predicated region
  $region42: #{decoder_forward.1} parent=0 // pred_check
    _
  $region43: #{decoder_forward.1} parent=0 // pred_check_branch
    %44 = sbr.rel (0) target = $region45
  $region44: #{decoder_forward.1} parent=0 // pred_region
    _
  $region45: #{decoder_forward.1} parent=0 // pred_fallthru
    _
  // Predicated region
  $region46: #{decoder_forward.1} parent=0 // pred_check
    _
  $region47: #{decoder_forward.1} parent=0 // pred_check_branch
    %46 = sbr.rel (0) target = $region49
  $region48: #{decoder_forward.1} parent=0 // pred_region
    _
  $region49: #{decoder_forward.1} parent=0 // pred_fallthru
    _
  // Predicated region
  $region50: #{decoder_forward.1} parent=0 // pred_check
    _
  $region51: #{decoder_forward.1} parent=0 // pred_check_branch
    %48 = sbr.rel (0) target = $region53
  $region52: #{decoder_forward.1} parent=0 // pred_region
    _
  $region53: #{decoder_forward.1} parent=0 // pred_fallthru
    _
  // Predicated region
  $region54: #{decoder_forward.1} parent=0 // pred_check
    _
  $region55: #{decoder_forward.1} parent=0 // pred_check_branch
    %50 = sbr.rel (0) target = $region57
  $region56: #{decoder_forward.1} parent=0 // pred_region
    _
  $region57: #{decoder_forward.1} parent=0 // pred_fallthru
    _
  // Predicated region
  $region58: #{decoder_forward.1} parent=0 // pred_check
    _
  $region59: #{decoder_forward.1} parent=0 // pred_check_branch
    %52 = sbr.rel (0) target = $region61
  $region60: #{decoder_forward.1} parent=0 // pred_region
    _
  $region61: #{decoder_forward.1} parent=0 // pred_fallthru
    _
  // Predicated region
  $region62: #{decoder_forward.1} parent=0 // pred_check
    _
  $region63: #{decoder_forward.1} parent=0 // pred_check_branch
    %54 = sbr.rel (0) target = $region65
  $region64: #{decoder_forward.1} parent=0 // pred_region
    _
  $region65: #{decoder_forward.1} parent=0 // pred_fallthru
    _
  // Predicated region
  $region66: #{decoder_forward.1} parent=0 // pred_check
    _
  $region67: #{decoder_forward.1} parent=0 // pred_check_branch
    %56 = sbr.rel (0) target = $region69
  $region68: #{decoder_forward.1} parent=0 // pred_region
    _
  $region69: #{decoder_forward.1} parent=0 // pred_fallthru
    _
  // Predicated region
  $region70: #{decoder_forward.1} parent=0 // pred_check
    _
  $region71: #{decoder_forward.1} parent=0 // pred_check_branch
    %58 = sbr.rel (0) target = $region73
  $region72: #{decoder_forward.1} parent=0 // pred_region
    _
  $region73: #{decoder_forward.1} parent=0 // pred_fallthru
    _
  %v59 = vld [vmem:[%s1] sm:$0xff]
  %v60 = vld [vmem:[%s2] sm:$0x1]
  %62 = vset.pattern.permute.xlu0 0
  %63 = vperm.xlu0 %62, %v59
  %v64 = vpop.permute.xlu0 %63
  %v67 = vperm.slane %v60, 0
  %v69 = vmul.f32 %v64, %v67
  %v70 = vld [vmem:[%s3] sm:$0x1]
  %v72 = vperm.slane %v70, 0
  %v74 = vadd.f32 %v69, %v72
  %v75 = vand.u32 2147483647, %v74
  %vm76 = vcmp.le.f32.partialorder %v75, 0.7853982
  %vm77 = vcmp.lt.s32.totalorder %v74, 0
  %v78 = vand.u32 %v74, 2139095040
  %v79 = vshrl.u32 %v78, 23
  %v80 = vsub.s32 %v79, 127
  %v81 = vand.u32 2147483647, %v74
  %v82 = vand.u32 %v81, 8388607
  %v83 = vor.u32 %v82, 8388608
  %v84 = vsub.s32 0, %v83
  %v85 = vadd.s32 %v80, 1
  %vm86 = vcmp.gt.s32.totalorder %v85, 0
  %v87 = vsel %vm86, %v85, 0
  %v88 = vshrl.u32 %v87, 5
  %v89 = vand.u32 %v87, 31
  %v90 = vsub.s32 32, %v89
  %v91 = vshrl.u32 683565275, %v90
  %v92 = vshll.u32 683565275, %v89
  %v93 = vshrl.u32 2475754826, %v90
  %v94 = vor.u32 %v92, %v93
  %v95 = vshll.u32 2475754826, %v89
  %v96 = vshrl.u32 2131351028, %v90
  %v97 = vor.u32 %v95, %v96
  %v98 = vshll.u32 2131351028, %v89
  %v99 = vshrl.u32 2102212464, %v90
  %v100 = vor.u32 %v98, %v99
  %v101 = vshll.u32 2102212464, %v89
  %v102 = vshrl.u32 920167782, %v90
  %v103 = vor.u32 %v101, %v102
  %v104 = vshll.u32 920167782, %v89
  %v105 = vshrl.u32 1326507024, %v90
  %v106 = vor.u32 %v104, %v105
  %vm107 = vcmp.lt.s32.totalorder %v88, 1
  %vm108 = vcmp.lt.s32.totalorder %v88, 2
  %vm109 = vcmp.lt.s32.totalorder %v88, 3
  %vm110 = vcmp.lt.s32.totalorder %v88, 4
  %v111 = vsel %vm107, %v91, %v94
  %v112 = vsel %vm110, %v100, 2102212464
  %v113 = vsel %vm109, %v97, %v112
  %v114 = vsel %vm108, %v111, %v113
  %v115 = vsel %vm107, %v94, %v97
  %v116 = vsel %vm110, %v103, 920167782
  %v117 = vsel %vm109, %v100, %v116
  %v118 = vsel %vm108, %v115, %v117
  %v119 = vsel %vm107, %v97, %v100
  %v120 = vsel %vm110, %v106, 1326507024
  %v121 = vsel %vm109, %v103, %v120
  %v122 = vsel %vm108, %v119, %v121
  %v123 = vshll.u32 %v83, 8
  %v124 = vand.u32 %v123, 65535
  %v125 = vshrl.u32 %v123, 16
  %v126 = vand.u32 %v122, 65535
  %v127 = vshrl.u32 %v122, 16
  %v128 = vmul.u32 %v124, %v126
  %v129 = vmul.u32 %v124, %v127
  %v130 = vmul.u32 %v125, %v126
  %v131 = vmul.u32 %v125, %v127
  %v132 = vshll.u32 %v129, 16
  %v133 = vshrl.u32 %v129, 16
  %v134 = vshll.u32 %v130, 16
  %v135 = vshrl.u32 %v130, 16
  %vm136 = vc.u32 %v128, %v132
  %v137 = vsel %vm136, 1, 0
  %v138 = vadd.s32 %v128, %v132
  %v139 = vadd.s32 %v131, %v137
  %vm140 = vc.u32 %v138, %v134
  %v141 = vsel %vm140, 1, 0
  %v142 = vadd.s32 %v138, %v134
  %v143 = vadd.s32 %v139, %v141
  %v144 = vadd.s32 %v143, %v133
  %v145 = vadd.s32 %v144, %v135
  %v146 = vand.u32 %v123, 65535
  %v147 = vshrl.u32 %v123, 16
  %v148 = vand.u32 %v118, 65535
  %v149 = vshrl.u32 %v118, 16
  %v150 = vmul.u32 %v146, %v148
  %v151 = vmul.u32 %v146, %v149
  %v152 = vmul.u32 %v147, %v148
  %v153 = vmul.u32 %v147, %v149
  %v154 = vshll.u32 %v151, 16
  %v155 = vshrl.u32 %v151, 16
  %v156 = vshll.u32 %v152, 16
  %v157 = vshrl.u32 %v152, 16
  %vm158 = vc.u32 %v150, %v154
  %v159 = vsel %vm158, 1, 0
  %v160 = vadd.s32 %v150, %v154
  %v161 = vadd.s32 %v153, %v159
  %vm162 = vc.u32 %v160, %v156
  %v163 = vsel %vm162, 1, 0
  %v164 = vadd.s32 %v160, %v156
  %v165 = vadd.s32 %v161, %v163
  %v166 = vadd.s32 %v165, %v155
  %v167 = vadd.s32 %v166, %v157
  %v168 = vmul.u32 %v123, %v114
  %v169 = vadd.s32 %v145, %v164
  %vm170 = vc.u32 %v145, %v164
  %v171 = vadd.s32 %v167, 1
  %v172 = vsel %vm170, %v171, %v167
  %v173 = vadd.s32 %v168, %v172
  %v174 = vadd.s32 %v173, 536870912
  %v175 = vshrl.u32 %v174, 30
  %v176 = vshll.u32 %v175, 30
  %v177 = vsub.s32 %v173, %v176
  %vm178 = vcmp.lt.s32.totalorder %v177, 0
  %v179 = vsub.s32 0, %v177
  %v180 = vsel %vm178, %v179, %v177
  %v181 = vclz %v180
  %v182 = vsub.s32 %v181, 2
  %vm183 = vcmp.gt.s32.totalorder 0, %v182
  %v184 = vsel %vm183, 0, %v182
  %v185 = vsub.s32 32, %v184
  %v186 = vshll.u32 %v177, %v184
  %v187 = vshrl.u32 %v169, %v185
  %v188 = vor.u32 %v186, %v187
  %v189 = vsub.s32 4294967266, %v184
  %v190 = vadd.s32 %v189, 127
  %v191 = vshll.u32 %v190, 23
  %v192 = vor.u32 4788187, %v191
  %v193 = vand.u32 2147483647, %v192
  %v195 = vcvt.s32.f32 %v188
  %v196 = vmul.f32 %v195, %v193
  %v197 = vxor.u32 %v196, 2147483648
  %v198 = vsel %vm77, %v197, %v196
  %v199 = vsub.s32 4, %v175
  %v200 = vsel %vm77, %v199, %v175
  %v201 = vsel %vm76, %v74, %v198
  %v202 = vsel %vm76, 0, %v200
  %v203 = vmul.f32 %v201, %v201
  %v204 = vmul.f32 %v203, -0.001358992
  %v205 = vadd.f32 %v204, 0.041655596
  %v206 = vmul.f32 %v203, %v205
  %v207 = vadd.f32 %v206, -0.4999988
  %v208 = vmul.f32 %v203, %v207
  %v209 = vadd.f32 1.0, %v208
  %v210 = vmul.f32 %v201, %v201
  %v211 = vmul.f32 %v210, -0.00019511016
  %v212 = vadd.f32 %v211, 0.008332121
  %v213 = vmul.f32 %v210, %v212
  %v214 = vadd.f32 %v213, -0.16666654
  %v215 = vmul.f32 %v210, %v214
  %v216 = vadd.f32 %v215, 1.0
  %v217 = vmul.f32 %v216, %v201
  %vm218 = vweird.f32 %v74
  %v219 = vadd.s32 %v202, 3
  %v220 = vand.u32 %v219, 3
  %vm221 = vcmp.lt.s32.totalorder %v220, 2
  %vm222 = vcmp.eq.s32.totalorder %v220, 0
  %v223 = vxor.u32 %v217, 2147483648
  %v224 = vsel %vm222, %v209, %v223
  %vm225 = vcmp.eq.s32.totalorder %v220, 2
  %v226 = vxor.u32 %v209, 2147483648
  %v227 = vsel %vm225, %v226, %v217
  %v228 = vsel %vm221, %v224, %v227
  %v229 = vsel %vm218, nan, %v228
  %v230 = vld [vmem:[%s4] sm:$0xff]
  %v231 = vld [vmem:[%s4 + $0x8] sm:$0xff]
  %v232 = vld [vmem:[%s4 + $0x10] sm:$0xff]
  %v233 = vld [vmem:[%s4 + $0x18] sm:$0xff]
  %v234 = vld [vmem:[%s4 + $0x20] sm:$0xff]
  %v235 = vld [vmem:[%s4 + $0x28] sm:$0xff]
  %v236 = vld [vmem:[%s4 + $0x30] sm:$0xff]
  %v237 = vld [vmem:[%s4 + $0x38] sm:$0xff]
  %v238 = vld [vmem:[%s4 + $0x40] sm:$0xff]
  %v239 = vld [vmem:[%s4 + $0x48] sm:$0xff]
  %v240 = vld [vmem:[%s4 + $0x50] sm:$0xff]
  %v241 = vld [vmem:[%s4 + $0x58] sm:$0xff]
  %v242 = vld [vmem:[%s4 + $0x60] sm:$0xff]
  %v243 = vld [vmem:[%s4 + $0x68] sm:$0xff]
  %v244 = vld [vmem:[%s4 + $0x70] sm:$0xff]
  %v245 = vld [vmem:[%s4 + $0x78] sm:$0xff]
  %v246 = vld [vmem:[%s5] sm:$0x1]
  %v248 = vperm.slane %v246, 0
  %250 = vmatpush.msra.mxu0 %v245
  %251 = vmatpush.msra.mxu0 %v244
  %252 = vmatpush.msra.mxu0 %v243
  %253 = vmatpush.msra.mxu0 %v242
  %254 = vmatpush.msra.mxu0 %v241
  %255 = vmatpush.msra.mxu0 %v240
  %256 = vmatpush.msra.mxu0 %v239
  %257 = vmatpush.msra.mxu0 %v238
  %258 = vmatpush.msra.mxu0 %v237
  %259 = vmatpush.msra.mxu0 %v236
  %260 = vmatpush.msra.mxu0 %v235
  %261 = vmatpush.msra.mxu0 %v234
  %262 = vmatpush.msra.mxu0 %v233
  %263 = vmatpush.msra.mxu0 %v232
  %264 = vmatpush.msra.mxu0 %v231
  %265 = vmatpush.msra.mxu0 %v230
  %266 = vmatmul.f32.gmra.mxu0 %v229
  %v267 = vpop.f32.mrf.mxu0
  %v268 = vadd.f32 %v248, %v267
  %269 = vdwg.mxu0
  %v270 = vmul.f32 %v268, 0.02
  %v271 = vmax.f32 %v268, %v270
  %v272 = vpack.c.bf16 %v271, %v271
  %v273 = vld [vmem:[%s13] sm:$0xf]
  %v274 = vld [vmem:[%s13 + $0x4] sm:$0xf]
  %v275 = vld [vmem:[%s13 + $0x8] sm:$0xf]
  %v276 = vld [vmem:[%s13 + $0xc] sm:$0xf]
  %v277 = vld [vmem:[%s13 + $0x10] sm:$0xf]
  %v278 = vld [vmem:[%s13 + $0x14] sm:$0xf]
  %v279 = vld [vmem:[%s13 + $0x18] sm:$0xf]
  %v280 = vld [vmem:[%s13 + $0x1c] sm:$0xf]
  %v281 = vld [vmem:[%s13 + $0x20] sm:$0xf]
  %v282 = vld [vmem:[%s13 + $0x24] sm:$0xf]
  %v283 = vld [vmem:[%s13 + $0x28] sm:$0xf]
  %v284 = vld [vmem:[%s13 + $0x2c] sm:$0xf]
  %v285 = vld [vmem:[%s13 + $0x30] sm:$0xf]
  %v286 = vld [vmem:[%s13 + $0x34] sm:$0xf]
  %v287 = vld [vmem:[%s13 + $0x38] sm:$0xf]
  %v288 = vld [vmem:[%s13 + $0x3c] sm:$0xf]
  %v289 = vld [vmem:[%s14] sm:$0x1]
  %v291 = vperm.slane %v289, 0
  %v309 = vunpack.c.l.b16 %v273
  %v310 = vunpack.c.l.b16 %v274
  %v311 = vunpack.c.l.b16 %v275
  %v312 = vunpack.c.l.b16 %v276
  %v313 = vunpack.c.l.b16 %v277
  %v314 = vunpack.c.l.b16 %v278
  %v315 = vunpack.c.l.b16 %v279
  %v316 = vunpack.c.l.b16 %v280
  %v317 = vunpack.c.l.b16 %v281
  %v318 = vunpack.c.l.b16 %v282
  %v319 = vunpack.c.l.b16 %v283
  %v320 = vunpack.c.l.b16 %v284
  %v321 = vunpack.c.l.b16 %v285
  %v322 = vunpack.c.l.b16 %v286
  %v323 = vunpack.c.l.b16 %v287
  %v324 = vunpack.c.l.b16 %v288
  %v325 = vpack.c.b16 %v310, %v309
  %v326 = vpack.c.b16 %v312, %v311
  %v327 = vpack.c.b16 %v314, %v313
  %v328 = vpack.c.b16 %v316, %v315
  %v329 = vpack.c.b16 %v318, %v317
  %v330 = vpack.c.b16 %v320, %v319
  %v331 = vpack.c.b16 %v322, %v321
  %v332 = vpack.c.b16 %v324, %v323
  %341 = vmatpush.bf16.msra.mxu0 %v332
  %342 = vmatpush.bf16.msra.mxu0 %v331
  %343 = vmatpush.bf16.msra.mxu0 %v330
  %344 = vmatpush.bf16.msra.mxu0 %v329
  %345 = vmatpush.bf16.msra.mxu0 %v328
  %346 = vmatpush.bf16.msra.mxu0 %v327
  %347 = vmatpush.bf16.msra.mxu0 %v326
  %348 = vmatpush.bf16.msra.mxu0 %v325
  %349 = vmatmul.bf16.gmra.mxu0 %v272
  %v350 = vpop.f32.mrf.mxu0
  %v351 = vadd.f32 %v291, %v350
  %v352 = vpop.f32.mrf.mxu0
  %353 = vdwg.mxu0
  %v354 = vld [vmem:[%s0] sm:$0xff]
  %v355 = vld [vmem:[%s6] sm:$0x3]
  %357 = vset.pattern.permute.xlu0 0
  %358 = vperm.xlu0 %357, %v354
  %v359 = vpop.permute.xlu0 %358
  %v361 = vperm.slane %v355, 0
  %v362 = vmul.f32 %v359, %v361
  %363 = vset.pattern.permute.xlu0 1
  %364 = vperm.xlu0 %363, %v354
  %v365 = vpop.permute.xlu0 %364
  %v367 = vperm.slane %v355, 1
  %v368 = vmul.f32 %v365, %v367
  %v369 = vadd.f32 %v362, %v368
  %v370 = vld [vmem:[%s17] sm:$0xff]
  %v371 = vld [vmem:[%s17 + $0x8] sm:$0xff]
  %v372 = vld [vmem:[%s17 + $0x10] sm:$0xff]
  %v373 = vld [vmem:[%s17 + $0x18] sm:$0xff]
  %v374 = vld [vmem:[%s17 + $0x20] sm:$0xff]
  %v375 = vld [vmem:[%s17 + $0x28] sm:$0xff]
  %v376 = vld [vmem:[%s17 + $0x30] sm:$0xff]
  %v377 = vld [vmem:[%s17 + $0x38] sm:$0xff]
  %v378 = vld [vmem:[%s17 + $0x40] sm:$0xff]
  %v379 = vld [vmem:[%s17 + $0x48] sm:$0xff]
  %v380 = vld [vmem:[%s17 + $0x50] sm:$0xff]
  %v381 = vld [vmem:[%s17 + $0x58] sm:$0xff]
  %v382 = vld [vmem:[%s17 + $0x60] sm:$0xff]
  %v383 = vld [vmem:[%s17 + $0x68] sm:$0xff]
  %v384 = vld [vmem:[%s17 + $0x70] sm:$0xff]
  %v385 = vld [vmem:[%s17 + $0x78] sm:$0xff]
  %v386 = vld [vmem:[%s7] sm:$0x1]
  %v387 = vld [vmem:[%s8] sm:$0x1]
  %v388 = vld [vmem:[%s10] sm:$0x1]
  %v389 = vld [vmem:[%s11] sm:$0x1]
  %390 = vmatpush.msra.mxu0 %v385
  %391 = vmatpush.msra.mxu0 %v384
  %392 = vmatpush.msra.mxu0 %v383
  %393 = vmatpush.msra.mxu0 %v382
  %394 = vmatpush.msra.mxu0 %v381
  %395 = vmatpush.msra.mxu0 %v380
  %396 = vmatpush.msra.mxu0 %v379
  %397 = vmatpush.msra.mxu0 %v378
  %398 = vmatpush.msra.mxu0 %v377
  %399 = vmatpush.msra.mxu0 %v376
  %400 = vmatpush.msra.mxu0 %v375
  %401 = vmatpush.msra.mxu0 %v374
  %402 = vmatpush.msra.mxu0 %v373
  %403 = vmatpush.msra.mxu0 %v372
  %404 = vmatpush.msra.mxu0 %v371
  %405 = vmatpush.msra.mxu0 %v370
  %406 = vmatmul.f32.gmra.mxu0 %v369
  %v407 = vpop.f32.mrf.mxu0
  %v408 = vadd.f32 0.0, %v407
  %409 = vdwg.mxu0
  %v410 = vmul.f32 %v369, %v369
  %411 = vmatpush.msra.mxu0 %v385
  %412 = vmatpush.msra.mxu0 %v384
  %413 = vmatpush.msra.mxu0 %v383
  %414 = vmatpush.msra.mxu0 %v382
  %415 = vmatpush.msra.mxu0 %v381
  %416 = vmatpush.msra.mxu0 %v380
  %417 = vmatpush.msra.mxu0 %v379
  %418 = vmatpush.msra.mxu0 %v378
  %419 = vmatpush.msra.mxu0 %v377
  %420 = vmatpush.msra.mxu0 %v376
  %421 = vmatpush.msra.mxu0 %v375
  %422 = vmatpush.msra.mxu0 %v374
  %423 = vmatpush.msra.mxu0 %v373
  %424 = vmatpush.msra.mxu0 %v372
  %425 = vmatpush.msra.mxu0 %v371
  %426 = vmatpush.msra.mxu0 %v370
  %427 = vmatmul.f32.gmra.mxu0 %v410
  %v428 = vpop.f32.mrf.mxu0
  %v429 = vadd.f32 0.0, %v428
  %430 = vdwg.mxu0
  %v431 = vmul.f32 %v408, 0.0078125
  %v432 = vmul.f32 %v429, 0.0078125
  %v433 = vmul.f32 %v431, %v431
  %v434 = vsub.f32 %v432, %v433
  %v435 = vmax.f32 %v434, 0.0
  %v436 = vadd.f32 %v435, 1e-05
  %v437 = vrsqrt.pop %v436
  %v438 = vmul.f32 %v437, %v436
  %v439 = vmul.f32 %v438, %v437
  %v440 = vmul.f32 0.5, %v439
  %v441 = vsub.f32 1.5, %v440
  %v442 = vmul.f32 %v437, %v441
  %vm443 = vweird.f32 %v436
  %vm444 = vweird.f32 %v437
  %vm445 = vmor %vm443, %vm444
  %v446 = vsel %vm445, %v437, %v442
  %v447 = vsub.f32 %v369, %v431
  %v448 = vmul.f32 %v447, %v446
  %v450 = vperm.slane %v386, 0
  %v452 = vmul.f32 %v448, %v450
  %v454 = vperm.slane %v387, 0
  %v456 = vadd.f32 %v452, %v454
  %v457 = vmul.f32 %v456, 0.02
  %v458 = vmax.f32 %v456, %v457
  %v459 = vpack.c.bf16 %v458, %v458
  %v460 = vld [vmem:[%s9] sm:$0xf]
  %v461 = vld [vmem:[%s9 + $0x4] sm:$0xf]
  %v462 = vld [vmem:[%s9 + $0x8] sm:$0xf]
  %v463 = vld [vmem:[%s9 + $0xc] sm:$0xf]
  %v464 = vld [vmem:[%s9 + $0x10] sm:$0xf]
  %v465 = vld [vmem:[%s9 + $0x14] sm:$0xf]
  %v466 = vld [vmem:[%s9 + $0x18] sm:$0xf]
  %v467 = vld [vmem:[%s9 + $0x1c] sm:$0xf]
  %v468 = vld [vmem:[%s9 + $0x20] sm:$0xf]
  %v469 = vld [vmem:[%s9 + $0x24] sm:$0xf]
  %v470 = vld [vmem:[%s9 + $0x28] sm:$0xf]
  %v471 = vld [vmem:[%s9 + $0x2c] sm:$0xf]
  %v472 = vld [vmem:[%s9 + $0x30] sm:$0xf]
  %v473 = vld [vmem:[%s9 + $0x34] sm:$0xf]
  %v474 = vld [vmem:[%s9 + $0x38] sm:$0xf]
  %v475 = vld [vmem:[%s9 + $0x3c] sm:$0xf]
  %v492 = vunpack.c.l.b16 %v460
  %v493 = vunpack.c.l.b16 %v461
  %v494 = vunpack.c.l.b16 %v462
  %v495 = vunpack.c.l.b16 %v463
  %v496 = vunpack.c.l.b16 %v464
  %v497 = vunpack.c.l.b16 %v465
  %v498 = vunpack.c.l.b16 %v466
  %v499 = vunpack.c.l.b16 %v467
  %v500 = vunpack.c.l.b16 %v468
  %v501 = vunpack.c.l.b16 %v469
  %v502 = vunpack.c.l.b16 %v470
  %v503 = vunpack.c.l.b16 %v471
  %v504 = vunpack.c.l.b16 %v472
  %v505 = vunpack.c.l.b16 %v473
  %v506 = vunpack.c.l.b16 %v474
  %v507 = vunpack.c.l.b16 %v475
  %v508 = vpack.c.b16 %v493, %v492
  %v509 = vpack.c.b16 %v495, %v494
  %v510 = vpack.c.b16 %v497, %v496
  %v511 = vpack.c.b16 %v499, %v498
  %v512 = vpack.c.b16 %v501, %v500
  %v513 = vpack.c.b16 %v503, %v502
  %v514 = vpack.c.b16 %v505, %v504
  %v515 = vpack.c.b16 %v507, %v506
  %524 = vmatpush.bf16.msra.mxu0 %v515
  %525 = vmatpush.bf16.msra.mxu0 %v514
  %526 = vmatpush.bf16.msra.mxu0 %v513
  %527 = vmatpush.bf16.msra.mxu0 %v512
  %528 = vmatpush.bf16.msra.mxu0 %v511
  %529 = vmatpush.bf16.msra.mxu0 %v510
  %530 = vmatpush.bf16.msra.mxu0 %v509
  %531 = vmatpush.bf16.msra.mxu0 %v508
  %532 = vmatmul.bf16.gmra.mxu0 %v459
  %v533 = vpop.f32.mrf.mxu0
  %v534 = vadd.f32 %v351, %v533
  %v535 = vpop.f32.mrf.mxu0
  %536 = vdwg.mxu0
  %537 = vmatpush.msra.mxu0 %v385
  %538 = vmatpush.msra.mxu0 %v384
  %539 = vmatpush.msra.mxu0 %v383
  %540 = vmatpush.msra.mxu0 %v382
  %541 = vmatpush.msra.mxu0 %v381
  %542 = vmatpush.msra.mxu0 %v380
  %543 = vmatpush.msra.mxu0 %v379
  %544 = vmatpush.msra.mxu0 %v378
  %545 = vmatpush.msra.mxu0 %v377
  %546 = vmatpush.msra.mxu0 %v376
  %547 = vmatpush.msra.mxu0 %v375
  %548 = vmatpush.msra.mxu0 %v374
  %549 = vmatpush.msra.mxu0 %v373
  %550 = vmatpush.msra.mxu0 %v372
  %551 = vmatpush.msra.mxu0 %v371
  %552 = vmatpush.msra.mxu0 %v370
  %553 = vmatmul.f32.gmra.mxu0 %v534
  %v554 = vpop.f32.mrf.mxu0
  %v555 = vadd.f32 0.0, %v554
  %556 = vdwg.mxu0
  %v557 = vmul.f32 %v534, %v534
  %558 = vmatpush.msra.mxu0 %v385
  %559 = vmatpush.msra.mxu0 %v384
  %560 = vmatpush.msra.mxu0 %v383
  %561 = vmatpush.msra.mxu0 %v382
  %562 = vmatpush.msra.mxu0 %v381
  %563 = vmatpush.msra.mxu0 %v380
  %564 = vmatpush.msra.mxu0 %v379
  %565 = vmatpush.msra.mxu0 %v378
  %566 = vmatpush.msra.mxu0 %v377
  %567 = vmatpush.msra.mxu0 %v376
  %568 = vmatpush.msra.mxu0 %v375
  %569 = vmatpush.msra.mxu0 %v374
  %570 = vmatpush.msra.mxu0 %v373
  %571 = vmatpush.msra.mxu0 %v372
  %572 = vmatpush.msra.mxu0 %v371
  %573 = vmatpush.msra.mxu0 %v370
  %574 = vmatmul.f32.gmra.mxu0 %v557
  %v575 = vpop.f32.mrf.mxu0
  %v576 = vadd.f32 0.0, %v575
  %577 = vdwg.mxu0
  %v578 = vmul.f32 %v555, 0.0078125
  %v579 = vmul.f32 %v576, 0.0078125
  %v580 = vmul.f32 %v578, %v578
  %v581 = vsub.f32 %v579, %v580
  %v582 = vmax.f32 %v581, 0.0
  %v583 = vadd.f32 %v582, 1e-05
  %v584 = vrsqrt.pop %v583
  %v585 = vmul.f32 %v584, %v583
  %v586 = vmul.f32 %v585, %v584
  %v587 = vmul.f32 0.5, %v586
  %v588 = vsub.f32 1.5, %v587
  %v589 = vmul.f32 %v584, %v588
  %vm590 = vweird.f32 %v583
  %vm591 = vweird.f32 %v584
  %vm592 = vmor %vm590, %vm591
  %v593 = vsel %vm592, %v584, %v589
  %v594 = vsub.f32 %v534, %v578
  %v595 = vmul.f32 %v594, %v593
  %v597 = vperm.slane %v388, 0
  %v599 = vmul.f32 %v595, %v597
  %v601 = vperm.slane %v389, 0
  %v603 = vadd.f32 %v599, %v601
  %v604 = vmul.f32 %v603, 0.02
  %v605 = vmax.f32 %v603, %v604
  %v606 = vpack.c.bf16 %v605, %v605
  %v607 = vld [vmem:[%s12] sm:$0xf]
  %v608 = vld [vmem:[%s12 + $0x4] sm:$0xf]
  %v609 = vld [vmem:[%s12 + $0x8] sm:$0xf]
  %v610 = vld [vmem:[%s12 + $0xc] sm:$0xf]
  %v611 = vld [vmem:[%s12 + $0x10] sm:$0xf]
  %v612 = vld [vmem:[%s12 + $0x14] sm:$0xf]
  %v613 = vld [vmem:[%s12 + $0x18] sm:$0xf]
  %v614 = vld [vmem:[%s12 + $0x1c] sm:$0xf]
  %v615 = vld [vmem:[%s12 + $0x20] sm:$0xf]
  %v616 = vld [vmem:[%s12 + $0x24] sm:$0xf]
  %v617 = vld [vmem:[%s12 + $0x28] sm:$0xf]
  %v618 = vld [vmem:[%s12 + $0x2c] sm:$0xf]
  %v619 = vld [vmem:[%s12 + $0x30] sm:$0xf]
  %v620 = vld [vmem:[%s12 + $0x34] sm:$0xf]
  %v621 = vld [vmem:[%s12 + $0x38] sm:$0xf]
  %v622 = vld [vmem:[%s12 + $0x3c] sm:$0xf]
  %v639 = vunpack.c.l.b16 %v607
  %v640 = vunpack.c.l.b16 %v608
  %v641 = vunpack.c.l.b16 %v609
  %v642 = vunpack.c.l.b16 %v610
  %v643 = vunpack.c.l.b16 %v611
  %v644 = vunpack.c.l.b16 %v612
  %v645 = vunpack.c.l.b16 %v613
  %v646 = vunpack.c.l.b16 %v614
  %v647 = vunpack.c.l.b16 %v615
  %v648 = vunpack.c.l.b16 %v616
  %v649 = vunpack.c.l.b16 %v617
  %v650 = vunpack.c.l.b16 %v618
  %v651 = vunpack.c.l.b16 %v619
  %v652 = vunpack.c.l.b16 %v620
  %v653 = vunpack.c.l.b16 %v621
  %v654 = vunpack.c.l.b16 %v622
  %v655 = vpack.c.b16 %v640, %v639
  %v656 = vpack.c.b16 %v642, %v641
  %v657 = vpack.c.b16 %v644, %v643
  %v658 = vpack.c.b16 %v646, %v645
  %v659 = vpack.c.b16 %v648, %v647
  %v660 = vpack.c.b16 %v650, %v649
  %v661 = vpack.c.b16 %v652, %v651
  %v662 = vpack.c.b16 %v654, %v653
  %671 = vmatpush.bf16.msra.mxu0 %v662
  %672 = vmatpush.bf16.msra.mxu0 %v661
  %673 = vmatpush.bf16.msra.mxu0 %v660
  %674 = vmatpush.bf16.msra.mxu0 %v659
  %675 = vmatpush.bf16.msra.mxu0 %v658
  %676 = vmatpush.bf16.msra.mxu0 %v657
  %677 = vmatpush.bf16.msra.mxu0 %v656
  %678 = vmatpush.bf16.msra.mxu0 %v655
  %679 = vmatmul.bf16.gmra.mxu0 %v606
  %v680 = vpop.f32.mrf.mxu0
  %v681 = vadd.f32 %v369, %v680
  %v682 = vpop.f32.mrf.mxu0
  %683 = vdwg.mxu0
  %684 = vmatpush.msra.mxu0 %v385
  %685 = vmatpush.msra.mxu0 %v384
  %686 = vmatpush.msra.mxu0 %v383
  %687 = vmatpush.msra.mxu0 %v382
  %688 = vmatpush.msra.mxu0 %v381
  %689 = vmatpush.msra.mxu0 %v380
  %690 = vmatpush.msra.mxu0 %v379
  %691 = vmatpush.msra.mxu0 %v378
  %692 = vmatpush.msra.mxu0 %v377
  %693 = vmatpush.msra.mxu0 %v376
  %694 = vmatpush.msra.mxu0 %v375
  %695 = vmatpush.msra.mxu0 %v374
  %696 = vmatpush.msra.mxu0 %v373
  %697 = vmatpush.msra.mxu0 %v372
  %698 = vmatpush.msra.mxu0 %v371
  %699 = vmatpush.msra.mxu0 %v370
  %700 = vmatmul.f32.gmra.mxu0 %v681
  %v701 = vpop.f32.mrf.mxu0
  %v702 = vadd.f32 0.0, %v701
  %703 = vdwg.mxu0
  %v704 = vmul.f32 %v681, %v681
  %705 = vmatpush.msra.mxu0 %v385
  %706 = vmatpush.msra.mxu0 %v384
  %707 = vmatpush.msra.mxu0 %v383
  %708 = vmatpush.msra.mxu0 %v382
  %709 = vmatpush.msra.mxu0 %v381
  %710 = vmatpush.msra.mxu0 %v380
  %711 = vmatpush.msra.mxu0 %v379
  %712 = vmatpush.msra.mxu0 %v378
  %713 = vmatpush.msra.mxu0 %v377
  %714 = vmatpush.msra.mxu0 %v376
  %715 = vmatpush.msra.mxu0 %v375
  %716 = vmatpush.msra.mxu0 %v374
  %717 = vmatpush.msra.mxu0 %v373
  %718 = vmatpush.msra.mxu0 %v372
  %719 = vmatpush.msra.mxu0 %v371
  %720 = vmatpush.msra.mxu0 %v370
  %721 = vmatmul.f32.gmra.mxu0 %v704
  %v722 = vpop.f32.mrf.mxu0
  %v723 = vadd.f32 0.0, %v722
  %724 = vdwg.mxu0
  %v725 = vmul.f32 %v702, 0.0078125
  %v726 = vmul.f32 %v723, 0.0078125
  %v727 = vmul.f32 %v725, %v725
  %v728 = vsub.f32 %v726, %v727
  %v729 = vmax.f32 %v728, 0.0
  %v730 = vadd.f32 %v729, 1e-05
  %v731 = vrsqrt.pop %v730
  %v732 = vmul.f32 %v731, %v730
  %v733 = vmul.f32 %v732, %v731
  %v734 = vmul.f32 0.5, %v733
  %v735 = vsub.f32 1.5, %v734
  %v736 = vmul.f32 %v731, %v735
  %vm737 = vweird.f32 %v730
  %vm738 = vweird.f32 %v731
  %vm739 = vmor %vm737, %vm738
  %v740 = vsel %vm739, %v731, %v736
  %v741 = vsub.f32 %v681, %v725
  %v742 = vmul.f32 %v741, %v740
  %v743 = vmul.f32 %v742, %v450
  %v744 = vadd.f32 %v743, %v454
  %v745 = vmul.f32 %v744, 0.02
  %v746 = vmax.f32 %v744, %v745
  %v747 = vpack.c.bf16 %v746, %v746
  %748 = vmatpush.bf16.msra.mxu0 %v515
  %749 = vmatpush.bf16.msra.mxu0 %v514
  %750 = vmatpush.bf16.msra.mxu0 %v513
  %751 = vmatpush.bf16.msra.mxu0 %v512
  %752 = vmatpush.bf16.msra.mxu0 %v511
  %753 = vmatpush.bf16.msra.mxu0 %v510
  %754 = vmatpush.bf16.msra.mxu0 %v509
  %755 = vmatpush.bf16.msra.mxu0 %v508
  %756 = vmatmul.bf16.gmra.mxu0 %v747
  %v757 = vpop.f32.mrf.mxu0
  %v758 = vadd.f32 %v351, %v757
  %v759 = vpop.f32.mrf.mxu0
  %760 = vdwg.mxu0
  %761 = vmatpush.msra.mxu0 %v385
  %762 = vmatpush.msra.mxu0 %v384
  %763 = vmatpush.msra.mxu0 %v383
  %764 = vmatpush.msra.mxu0 %v382
  %765 = vmatpush.msra.mxu0 %v381
  %766 = vmatpush.msra.mxu0 %v380
  %767 = vmatpush.msra.mxu0 %v379
  %768 = vmatpush.msra.mxu0 %v378
  %769 = vmatpush.msra.mxu0 %v377
  %770 = vmatpush.msra.mxu0 %v376
  %771 = vmatpush.msra.mxu0 %v375
  %772 = vmatpush.msra.mxu0 %v374
  %773 = vmatpush.msra.mxu0 %v373
  %774 = vmatpush.msra.mxu0 %v372
  %775 = vmatpush.msra.mxu0 %v371
  %776 = vmatpush.msra.mxu0 %v370
  %777 = vmatmul.f32.gmra.mxu0 %v758
  %v778 = vpop.f32.mrf.mxu0
  %v779 = vadd.f32 0.0, %v778
  %780 = vdwg.mxu0
  %v781 = vmul.f32 %v758, %v758
  %782 = vmatpush.msra.mxu0 %v385
  %783 = vmatpush.msra.mxu0 %v384
  %784 = vmatpush.msra.mxu0 %v383
  %785 = vmatpush.msra.mxu0 %v382
  %786 = vmatpush.msra.mxu0 %v381
  %787 = vmatpush.msra.mxu0 %v380
  %788 = vmatpush.msra.mxu0 %v379
  %789 = vmatpush.msra.mxu0 %v378
  %790 = vmatpush.msra.mxu0 %v377
  %791 = vmatpush.msra.mxu0 %v376
  %792 = vmatpush.msra.mxu0 %v375
  %793 = vmatpush.msra.mxu0 %v374
  %794 = vmatpush.msra.mxu0 %v373
  %795 = vmatpush.msra.mxu0 %v372
  %796 = vmatpush.msra.mxu0 %v371
  %797 = vmatpush.msra.mxu0 %v370
  %798 = vmatmul.f32.gmra.mxu0 %v781
  %v799 = vpop.f32.mrf.mxu0
  %v800 = vadd.f32 0.0, %v799
  %801 = vdwg.mxu0
  %v802 = vmul.f32 %v779, 0.0078125
  %v803 = vmul.f32 %v800, 0.0078125
  %v804 = vmul.f32 %v802, %v802
  %v805 = vsub.f32 %v803, %v804
  %v806 = vmax.f32 %v805, 0.0
  %v807 = vadd.f32 %v806, 1e-05
  %v808 = vrsqrt.pop %v807
  %v809 = vmul.f32 %v808, %v807
  %v810 = vmul.f32 %v809, %v808
  %v811 = vmul.f32 0.5, %v810
  %v812 = vsub.f32 1.5, %v811
  %v813 = vmul.f32 %v808, %v812
  %vm814 = vweird.f32 %v807
  %vm815 = vweird.f32 %v808
  %vm816 = vmor %vm814, %vm815
  %v817 = vsel %vm816, %v808, %v813
  %v818 = vsub.f32 %v758, %v802
  %v819 = vmul.f32 %v818, %v817
  %v820 = vmul.f32 %v819, %v597
  %v821 = vadd.f32 %v820, %v601
  %v822 = vmul.f32 %v821, 0.02
  %v823 = vmax.f32 %v821, %v822
  %v824 = vpack.c.bf16 %v823, %v823
  %825 = vmatpush.bf16.msra.mxu0 %v662
  %826 = vmatpush.bf16.msra.mxu0 %v661
  %827 = vmatpush.bf16.msra.mxu0 %v660
  %828 = vmatpush.bf16.msra.mxu0 %v659
  %829 = vmatpush.bf16.msra.mxu0 %v658
  %830 = vmatpush.bf16.msra.mxu0 %v657
  %831 = vmatpush.bf16.msra.mxu0 %v656
  %832 = vmatpush.bf16.msra.mxu0 %v655
  %833 = vmatmul.bf16.gmra.mxu0 %v824
  %v834 = vpop.f32.mrf.mxu0
  %v835 = vadd.f32 %v681, %v834
  %v836 = vpop.f32.mrf.mxu0
  %837 = vdwg.mxu0
  %838 = vmatpush.msra.mxu0 %v385
  %839 = vmatpush.msra.mxu0 %v384
  %840 = vmatpush.msra.mxu0 %v383
  %841 = vmatpush.msra.mxu0 %v382
  %842 = vmatpush.msra.mxu0 %v381
  %843 = vmatpush.msra.mxu0 %v380
  %844 = vmatpush.msra.mxu0 %v379
  %845 = vmatpush.msra.mxu0 %v378
  %846 = vmatpush.msra.mxu0 %v377
  %847 = vmatpush.msra.mxu0 %v376
  %848 = vmatpush.msra.mxu0 %v375
  %849 = vmatpush.msra.mxu0 %v374
  %850 = vmatpush.msra.mxu0 %v373
  %851 = vmatpush.msra.mxu0 %v372
  %852 = vmatpush.msra.mxu0 %v371
  %853 = vmatpush.msra.mxu0 %v370
  %854 = vmatmul.f32.gmra.mxu0 %v835
  %v855 = vpop.f32.mrf.mxu0
  %v856 = vadd.f32 0.0, %v855
  %857 = vdwg.mxu0
  %v858 = vmul.f32 %v835, %v835
  %859 = vmatpush.msra.mxu0 %v385
  %860 = vmatpush.msra.mxu0 %v384
  %861 = vmatpush.msra.mxu0 %v383
  %862 = vmatpush.msra.mxu0 %v382
  %863 = vmatpush.msra.mxu0 %v381
  %864 = vmatpush.msra.mxu0 %v380
  %865 = vmatpush.msra.mxu0 %v379
  %866 = vmatpush.msra.mxu0 %v378
  %867 = vmatpush.msra.mxu0 %v377
  %868 = vmatpush.msra.mxu0 %v376
  %869 = vmatpush.msra.mxu0 %v375
  %870 = vmatpush.msra.mxu0 %v374
  %871 = vmatpush.msra.mxu0 %v373
  %872 = vmatpush.msra.mxu0 %v372
  %873 = vmatpush.msra.mxu0 %v371
  %874 = vmatpush.msra.mxu0 %v370
  %875 = vmatmul.f32.gmra.mxu0 %v858
  %v876 = vpop.f32.mrf.mxu0
  %v877 = vadd.f32 0.0, %v876
  %878 = vdwg.mxu0
  %v879 = vmul.f32 %v856, 0.0078125
  %v880 = vmul.f32 %v877, 0.0078125
  %v881 = vmul.f32 %v879, %v879
  %v882 = vsub.f32 %v880, %v881
  %v883 = vmax.f32 %v882, 0.0
  %v884 = vadd.f32 %v883, 1e-05
  %v885 = vrsqrt.pop %v884
  %v886 = vmul.f32 %v885, %v884
  %v887 = vmul.f32 %v886, %v885
  %v888 = vmul.f32 0.5, %v887
  %v889 = vsub.f32 1.5, %v888
  %v890 = vmul.f32 %v885, %v889
  %vm891 = vweird.f32 %v884
  %vm892 = vweird.f32 %v885
  %vm893 = vmor %vm891, %vm892
  %v894 = vsel %vm893, %v885, %v890
  %v895 = vsub.f32 %v835, %v879
  %v896 = vmul.f32 %v895, %v894
  %v897 = vpack.c.bf16 %v896, %v896
  %v898 = vld [vmem:[%s15] sm:$0xf]
  %v899 = vld [vmem:[%s15 + $0x4] sm:$0xf]
  %v900 = vld [vmem:[%s15 + $0x8] sm:$0xf]
  %v901 = vld [vmem:[%s15 + $0xc] sm:$0xf]
  %v902 = vld [vmem:[%s15 + $0x10] sm:$0xf]
  %v903 = vld [vmem:[%s15 + $0x14] sm:$0xf]
  %v904 = vld [vmem:[%s15 + $0x18] sm:$0xf]
  %v905 = vld [vmem:[%s15 + $0x1c] sm:$0xf]
  %v906 = vld [vmem:[%s15 + $0x20] sm:$0xf]
  %v907 = vld [vmem:[%s15 + $0x24] sm:$0xf]
  %v908 = vld [vmem:[%s15 + $0x28] sm:$0xf]
  %v909 = vld [vmem:[%s15 + $0x2c] sm:$0xf]
  %v910 = vld [vmem:[%s15 + $0x30] sm:$0xf]
  %v911 = vld [vmem:[%s15 + $0x34] sm:$0xf]
  %v912 = vld [vmem:[%s15 + $0x38] sm:$0xf]
  %v913 = vld [vmem:[%s15 + $0x3c] sm:$0xf]
  %v914 = vld [vmem:[%s16] sm:$0x1]
  %v916 = vperm.slane %v914, 0
  %v934 = vunpack.c.l.b16 %v898
  %v935 = vunpack.c.l.b16 %v899
  %v936 = vunpack.c.l.b16 %v900
  %v937 = vunpack.c.l.b16 %v901
  %v938 = vunpack.c.l.b16 %v902
  %v939 = vunpack.c.l.b16 %v903
  %v940 = vunpack.c.l.b16 %v904
  %v941 = vunpack.c.l.b16 %v905
  %v942 = vunpack.c.l.b16 %v906
  %v943 = vunpack.c.l.b16 %v907
  %v944 = vunpack.c.l.b16 %v908
  %v945 = vunpack.c.l.b16 %v909
  %v946 = vunpack.c.l.b16 %v910
  %v947 = vunpack.c.l.b16 %v911
  %v948 = vunpack.c.l.b16 %v912
  %v949 = vunpack.c.l.b16 %v913
  %v950 = vpack.c.b16 %v935, %v934
  %v951 = vpack.c.b16 %v937, %v936
  %v952 = vpack.c.b16 %v939, %v938
  %v953 = vpack.c.b16 %v941, %v940
  %v954 = vpack.c.b16 %v943, %v942
  %v955 = vpack.c.b16 %v945, %v944
  %v956 = vpack.c.b16 %v947, %v946
  %v957 = vpack.c.b16 %v949, %v948
  %966 = vmatpush.bf16.msra.mxu0 %v957
  %967 = vmatpush.bf16.msra.mxu0 %v956
  %968 = vmatpush.bf16.msra.mxu0 %v955
  %969 = vmatpush.bf16.msra.mxu0 %v954
  %970 = vmatpush.bf16.msra.mxu0 %v953
  %971 = vmatpush.bf16.msra.mxu0 %v952
  %972 = vmatpush.bf16.msra.mxu0 %v951
  %973 = vmatpush.bf16.msra.mxu0 %v950
  %974 = vmatmul.bf16.gmra.mxu0 %v897
  %v975 = vpop.f32.mrf.mxu0
  %v976 = vadd.f32 %v916, %v975
  %v977 = vpop.f32.mrf.mxu0
  %978 = vdwg.mxu0
  %vm979 = vcmask 15360
  %980 = vst.msk [vmem:[%s18] sm:$0xff] %vm979, %v976
  // Predicated region
  $region74: #{decoder_forward.1} parent=0 // pred_check
    _
  $region75: #{decoder_forward.1} parent=0 // pred_check_branch
    %982 = sbr.rel (0) target = $region77
  $region76: #{decoder_forward.1} parent=0 // pred_region
    _
  $region77: #{decoder_forward.1} parent=0 // pred_fallthru
    _
  // Predicated region
  $region78: #{decoder_forward.1} parent=0 // pred_check
    _
  $region79: #{decoder_forward.1} parent=0 // pred_check_branch
    %984 = sbr.rel (0) target = $region81
  $region80: #{decoder_forward.1} parent=0 // pred_region
    _
  $region81: #{decoder_forward.1} parent=0 // pred_fallthru
    _

</llo_original>
